<compile_context>
chip_gen: v7x
topology: tpu7x:2x2x1
jax: 0.10.0
libtpu: 0.0.40
codegen_flags: <defaults>
</compile_context>

<pallas_src>
import functools

import jax
import jax.numpy as jnp
from jax.experimental import pallas as pl
from jax.experimental.pallas import tpu as pltpu

BN_EPS = 1e-5
SEG = 208          # per-sample lane segment (205 input phase columns, padded)
SHIFT_PAD = 64     # scratch margin; the largest shift used below is 48


# ------------------------------ fused kernel --------------------------------

def _net_kernel(x_ref, m1_ref, m2_ref, m3_ref,
                w1_ref, s1_ref, w2_ref, s2_ref,
                w3_ref, s3_ref, w4_ref, s4_ref,
                pick_ref, fcw_ref, fcb_ref, o_ref, buf_ref):
    f32 = jnp.float32
    n = x_ref.shape[-1]                       # TB * SEG
    pad = SHIFT_PAD

    # Zero the scratch margins once per grid step.  Any shifted window that
    # runs past the tile edge then reads zeros, which is exactly the conv zero
    # padding / a neighbouring sample's (zeroed) junk lanes.
    buf_ref[:, :pad] = jnp.zeros((buf_ref.shape[0], pad), f32)
    buf_ref[:, pad + n:] = jnp.zeros((buf_ref.shape[0], pad), f32)

    def shifted(val, offsets):
        """Store `val` once; return lane-shifted reads: out[o][:, i] = val[:, i+o]."""
        c = val.shape[0]
        buf_ref[:c, pad:pad + n] = val
        return [buf_ref[:c, pad + o:pad + o + n] for o in offsets]

    # ---- layer 1: conv1(1->16, K=80, s=4, pad=38) + BN + ReLU + MaxPool(4).
    # One (64, 96) @ (96, n) matmul; LHS rows are (pool phase d, channel o).
    r1 = jnp.concatenate(shifted(x_ref[...], list(range(6))), axis=0)  # (96, n)
    y1 = jnp.dot(w1_ref[...], r1, preferred_element_type=f32)          # (64, n)
    pooled = jnp.maximum(jnp.maximum(y1[0:16], y1[16:32]),
                         jnp.maximum(y1[32:48], y1[48:64]))
    x = jnp.maximum(pooled + s1_ref[...], 0.0) * m1_ref[...]           # (16, n)

    # ---- layers 2..4: conv(K=3, pad=1) + BN + ReLU + MaxPool(4).
    # Activations stay on the 208-lane per-sample grid with true values every
    # `dil` lanes (zeros elsewhere), so taps/pool phases are lane shifts and
    # the conv is ONE (Cout, 3*Cin) @ (3*Cin, n) matmul per layer.
    for w_ref, s_ref, m_ref, dil in ((w2_ref, s2_ref, m2_ref, 1),
                                     (w3_ref, s3_ref, m3_ref, 4),
                                     (w4_ref, s4_ref, None, 16)):
        xm, xp = shifted(x, [-dil, dil])
        rhs = jnp.concatenate([xm, x, xp], axis=0)                     # (3C, n)
        y = jnp.dot(w_ref[...], rhs, preferred_element_type=f32)       # (Cout, n)
        ya, yb, yc = shifted(y, [dil, 2 * dil, 3 * dil])
        pooled = jnp.maximum(jnp.maximum(y, ya), jnp.maximum(yb, yc))
        x = jnp.maximum(pooled + s_ref[...], 0.0)
        if m_ref is not None:
            x = x * m_ref[...]               # zero non-true ("junk") lanes

    # ---- AvgPool1d(3) + permute + fc0 + [:, 0, :]: one pick/average matmul
    # over the 3 true lanes per sample, then the FC; output is (6, TB).
    av = jnp.dot(x, pick_ref[...], preferred_element_type=f32)         # (64, TB)
    o_ref[...] = (jnp.dot(fcw_ref[...], av, preferred_element_type=f32)
                  + fcb_ref[...])


# ------------------------- host-side (wrapper) prep --------------------------

def _bn_fold(p):
    scale = p["gamma"] / jnp.sqrt(p["var"] + BN_EPS)
    shift = (p["b"] - p["mean"]) * scale + p["beta"]
    return scale, shift


def _prep_conv1_w(p):
    """(64, 96) merged conv1 weights: rows = pool-phase*16 + channel,
    cols = m*16 + t, value = w[o, 16m + t - 4d] (0 outside the kernel)."""
    scale, shift = _bn_fold(p)
    w = p["w"][:, 0, :] * scale[:, None]                         # (16, 80)
    d = jnp.arange(4)[:, None, None]
    m = jnp.arange(6)[None, :, None]
    t = jnp.arange(16)[None, None, :]
    k = 16 * m + t - 4 * d                                       # (4, 6, 16)
    valid = (k >= 0) & (k < 80)
    g = jnp.where(valid[None], w[:, jnp.clip(k, 0, 79)], 0.0)    # (16,4,6,16)
    w1 = jnp.transpose(g, (1, 0, 2, 3)).reshape(64, 96)
    return w1, shift[:, None]


def _prep_conv_w(p):
    """(Cout, 3*Cin) tap-stacked, BN-scaled conv weights (cols = k*Cin + c)."""
    scale, shift = _bn_fold(p)
    w = p["w"] * scale[:, None, None]                            # (Cout, Cin, 3)
    wcat = jnp.transpose(w, (0, 2, 1)).reshape(w.shape[0], -1)
    return wcat, shift[:, None]


# ------------------------------- full forward --------------------------------

def net_forward(params, x, batch_size, batch_tile=8):
    B = batch_size
    x = x.reshape(B, 3200).astype(jnp.float32)

    # Batch tile: batch goes on the lane axis; keep >=2 grid steps when B > 1
    # so v7x's two TensorCores both get work (grid axis is "parallel").
    TB = max(1, min(batch_tile, -(-B // 2)))
    G = -(-B // TB)
    Bp = G * TB
    if Bp != B:
        x = jnp.pad(x, ((0, Bp - B), (0, 0)))
    N = TB * SEG

    # Compact phase-decomposed input (~13 KB/sample, no 6x duplication):
    # lane b*SEG + q of row t holds xpad[b, 16*q + t].
    xpad = jnp.pad(x, ((0, 0), (38, 42)))                        # (Bp, 3280)
    x16 = xpad.reshape(Bp, 205, 16).transpose(0, 2, 1)           # (Bp, 16, 205)
    x16 = jnp.pad(x16, ((0, 0), (0, 0), (0, SEG - 205)))         # (Bp, 16, 208)
    x16 = (x16.reshape(G, TB, 16, SEG).transpose(0, 2, 1, 3)
              .reshape(G, 16, N))                                # (G, 16, N)

    w1, b1 = _prep_conv1_w(params["conv1"])
    w2, b2 = _prep_conv_w(params["conv2"])
    w3, b3 = _prep_conv_w(params["conv3"])
    w4, b4 = _prep_conv_w(params["conv4"])
    fcw = params["fc0"]["w"]
    fcb = params["fc0"]["b"][:, None]

    # Valid-lane masks (zero junk lanes so shifted reads see zeros == conv
    # padding) and the AvgPool/readout picker (1/3 at lanes {0, 64, 128}).
    q = jnp.arange(SEG)
    m1 = jnp.tile((q < 200).astype(jnp.float32), TB)[None, :]
    m2 = jnp.tile(((q % 4 == 0) & (q < 200)).astype(jnp.float32), TB)[None, :]
    m3 = jnp.tile(((q % 16 == 0) & (q < 192)).astype(jnp.float32), TB)[None, :]
    rows = (jnp.arange(TB)[:, None] * SEG
            + jnp.array([0, 64, 128])[None, :]).reshape(-1)
    cols = jnp.repeat(jnp.arange(TB), 3)
    pick = jnp.zeros((N, TB), jnp.float32).at[rows, cols].set(1.0 / 3.0)

    def full(shape):
        nd = len(shape)
        return pl.BlockSpec(shape, lambda g, _nd=nd: (0,) * _nd)

    out = pl.pallas_call(
        _net_kernel,
        out_shape=jax.ShapeDtypeStruct((G, 6, TB), jnp.float32),
        grid=(G,),
        in_specs=[
            pl.BlockSpec((None, 16, N), lambda g: (g, 0, 0)),    # input tile
            full((1, N)), full((1, N)), full((1, N)),            # lane masks
            full((64, 96)), full((16, 1)),                       # layer 1
            full((16, 48)), full((16, 1)),                       # layer 2
            full((32, 48)), full((32, 1)),                       # layer 3
            full((64, 96)), full((64, 1)),                       # layer 4
            full((N, TB)),                                       # avg/readout
            full((6, 64)), full((6, 1)),                         # fc0
        ],
        out_specs=pl.BlockSpec((None, 6, TB), lambda g: (g, 0, 0)),
        scratch_shapes=[pltpu.VMEM((64, N + 2 * SHIFT_PAD), jnp.float32)],
        compiler_params=pltpu.CompilerParams(
            dimension_semantics=("parallel",)),
    )(x16, m1, m2, m3, w1, b1, w2, b2, w3, b3, w4, b4, pick, fcw, fcb)

    return out.transpose(0, 2, 1).reshape(Bp, 6)[:B]             # (B, 6)


# ---------------------------- pure-JAX reference -----------------------------

def _conv_bn_relu_ref(x, w, b, gamma, beta, mean, var, stride, padding):
    B, Cin, Lin = x.shape
    Cout, _, K = w.shape
    Lout = (Lin + 2 * padding - K) // stride + 1
    xpad = jnp.pad(x, ((0, 0), (0, 0), (padding, padding)))
    idx = jnp.arange(Lout)[:, None] * stride + jnp.arange(K)[None, :]
    patches = xpad[:, :, idx]                                    # (B, Cin, Lout, K)
    y = jnp.einsum("bclk,ock->bol", patches, w) + b[None, :, None]
    y = ((y - mean[None, :, None]) / jnp.sqrt(var[None, :, None] + BN_EPS)
         * gamma[None, :, None] + beta[None, :, None])
    return jnp.maximum(y, 0.0)


def maxpool1d(x, k):
    B, C, L = x.shape
    Lo = L // k
    return x[:, :, :Lo * k].reshape(B, C, Lo, k).max(axis=-1)


_LAYER_CFG = [  # (stride, padding, pool_k)
    (4, 38, 4), (1, 1, 4), (1, 1, 4), (1, 1, 4),
]


def net_forward_ref(params, x, batch_size):
    x = x.reshape(batch_size, 1, 3200)
    for i, (stride, pad, pool_k) in enumerate(_LAYER_CFG):
        p = params[f"conv{i + 1}"]
        x = _conv_bn_relu_ref(x, p["w"], p["b"], p["gamma"], p["beta"],
                              p["mean"], p["var"], stride, pad)
        x = maxpool1d(x, pool_k)
    x = jnp.mean(x, axis=-1)                                     # (B, 64)
    return x @ params["fc0"]["w"].T + params["fc0"]["b"][None, :]


# -------------------------------- params init --------------------------------

def init_params(key):
    cfgs = [(1, 16, 80), (16, 16, 3), (16, 32, 3), (32, 64, 3)]  # (Cin, Cout, K)
    keys = jax.random.split(key, len(cfgs) * 6 + 2)
    params = {}
    ki = 0
    for i, (cin, cout, k) in enumerate(cfgs):
        bound = 1.0 / (cin * k) ** 0.5
        params[f"conv{i + 1}"] = dict(
            w=jax.random.uniform(keys[ki], (cout, cin, k), jnp.float32, -bound, bound),
            b=jax.random.uniform(keys[ki + 1], (cout,), jnp.float32, -bound, bound),
            gamma=1.0 + 0.1 * jax.random.normal(keys[ki + 2], (cout,), jnp.float32),
            beta=0.1 * jax.random.normal(keys[ki + 3], (cout,), jnp.float32),
            mean=0.1 * jax.random.normal(keys[ki + 4], (cout,), jnp.float32),
            var=1.0 + 0.1 * jax.random.uniform(keys[ki + 5], (cout,), jnp.float32),
        )
        ki += 6
    bound = 1.0 / 64 ** 0.5
    params["fc0"] = dict(
        w=jax.random.uniform(keys[ki], (6, 64), jnp.float32, -bound, bound),
        b=jax.random.uniform(keys[ki + 1], (6,), jnp.float32, -bound, bound),
    )
    return params


# ------------------------------------ main ------------------------------------

if __name__ == "__main__":
    B = 2
    key = jax.random.PRNGKey(0)
    kx, kp = jax.random.split(key)
    x = jax.random.normal(kx, (B, 3200), jnp.float32)
    params = init_params(kp)

    fwd = jax.jit(functools.partial(net_forward, batch_size=B))
    out = jax.block_until_ready(fwd(params, x))

    ref = net_forward_ref(params, x, B)

    assert out.shape == (B, 6), out.shape
    assert jnp.allclose(out, ref, rtol=1e-3, atol=1e-3), (out, ref)
    print("KERNEL_OK")
</pallas_src>

<mosaic_0001>
module attributes {stable_mosaic.version = 11 : i64} {
  func.func @_net_kernel(%arg0: i32, %arg1: memref<1x16x208xf32, #tpu.memory_space<vmem>>, %arg2: memref<1x208xf32, #tpu.memory_space<vmem>>, %arg3: memref<1x208xf32, #tpu.memory_space<vmem>>, %arg4: memref<1x208xf32, #tpu.memory_space<vmem>>, %arg5: memref<64x96xf32, #tpu.memory_space<vmem>>, %arg6: memref<16x1xf32, #tpu.memory_space<vmem>>, %arg7: memref<16x48xf32, #tpu.memory_space<vmem>>, %arg8: memref<16x1xf32, #tpu.memory_space<vmem>>, %arg9: memref<32x48xf32, #tpu.memory_space<vmem>>, %arg10: memref<32x1xf32, #tpu.memory_space<vmem>>, %arg11: memref<64x96xf32, #tpu.memory_space<vmem>>, %arg12: memref<64x1xf32, #tpu.memory_space<vmem>>, %arg13: memref<208x1xf32, #tpu.memory_space<vmem>>, %arg14: memref<6x64xf32, #tpu.memory_space<vmem>>, %arg15: memref<6x1xf32, #tpu.memory_space<vmem>>, %arg16: memref<1x6x1xf32, #tpu.memory_space<vmem>>, %arg17: memref<64x336xf32, #tpu.memory_space<vmem>>) attributes {dimension_semantics = [#tpu.dimension_semantics<parallel>], iteration_bounds = array<i64: 2>, scalar_prefetch = 0 : i64, scratch_operands = 1 : i64, tpu.core_type = #tpu.core_type<tc>, window_params = [{transform_indices = @transform_0, window_bounds = array<i64: 1, 16, 208>}, {pipeline_mode = #tpu.pipeline_mode<synchronous>, transform_indices = @transform_1, window_bounds = array<i64: 1, 208>}, {pipeline_mode = #tpu.pipeline_mode<synchronous>, transform_indices = @transform_2, window_bounds = array<i64: 1, 208>}, {pipeline_mode = #tpu.pipeline_mode<synchronous>, transform_indices = @transform_3, window_bounds = array<i64: 1, 208>}, {pipeline_mode = #tpu.pipeline_mode<synchronous>, transform_indices = @transform_4, window_bounds = array<i64: 64, 96>}, {pipeline_mode = #tpu.pipeline_mode<synchronous>, transform_indices = @transform_5, window_bounds = array<i64: 16, 1>}, {pipeline_mode = #tpu.pipeline_mode<synchronous>, transform_indices = @transform_6, window_bounds = array<i64: 16, 48>}, {pipeline_mode = #tpu.pipeline_mode<synchronous>, transform_indices = @transform_7, window_bounds = array<i64: 16, 1>}, {pipeline_mode = #tpu.pipeline_mode<synchronous>, transform_indices = @transform_8, window_bounds = array<i64: 32, 48>}, {pipeline_mode = #tpu.pipeline_mode<synchronous>, transform_indices = @transform_9, window_bounds = array<i64: 32, 1>}, {pipeline_mode = #tpu.pipeline_mode<synchronous>, transform_indices = @transform_10, window_bounds = array<i64: 64, 96>}, {pipeline_mode = #tpu.pipeline_mode<synchronous>, transform_indices = @transform_11, window_bounds = array<i64: 64, 1>}, {pipeline_mode = #tpu.pipeline_mode<synchronous>, transform_indices = @transform_12, window_bounds = array<i64: 208, 1>}, {pipeline_mode = #tpu.pipeline_mode<synchronous>, transform_indices = @transform_13, window_bounds = array<i64: 6, 64>}, {pipeline_mode = #tpu.pipeline_mode<synchronous>, transform_indices = @transform_14, window_bounds = array<i64: 6, 1>}, {transform_indices = @transform_15, window_bounds = array<i64: 1, 6, 1>}]} {
    %cst = arith.constant 0.000000e+00 : f32
    %0 = vector.broadcast %cst : f32 to vector<64x64xf32>
    %c0 = arith.constant 0 : index
    %c0_0 = arith.constant 0 : index
    %1 = vector.load %arg17[%c0, %c0_0] : memref<64x336xf32, #tpu.memory_space<vmem>>, vector<64x64xf32>
    tpu.vector_store %arg17[%c0, %c0_0], %0 {strides = array<i32>} : memref<64x336xf32, #tpu.memory_space<vmem>>, vector<64x64xf32>,
    %cst_1 = arith.constant 0.000000e+00 : f32
    %2 = vector.broadcast %cst_1 : f32 to vector<64x64xf32>
    %c0_2 = arith.constant 0 : index
    %c272 = arith.constant 272 : index
    %3 = vector.load %arg17[%c0_2, %c272] : memref<64x336xf32, #tpu.memory_space<vmem>>, vector<64x64xf32>
    tpu.vector_store %arg17[%c0_2, %c272], %2 {strides = array<i32>} : memref<64x336xf32, #tpu.memory_space<vmem>>, vector<64x64xf32>,
    %c0_3 = arith.constant 0 : index
    %c0_4 = arith.constant 0 : index
    %c0_5 = arith.constant 0 : index
    %4 = vector.load %arg1[%c0_3, %c0_4, %c0_5] : memref<1x16x208xf32, #tpu.memory_space<vmem>>, vector<1x16x208xf32>
    %5 = vector.shape_cast %4 : vector<1x16x208xf32> to vector<16x208xf32>
    %c0_6 = arith.constant 0 : index
    %c64 = arith.constant 64 : index
    %6 = vector.load %arg17[%c0_6, %c64] : memref<64x336xf32, #tpu.memory_space<vmem>>, vector<16x208xf32>
    tpu.vector_store %arg17[%c0_6, %c64], %5 {strides = array<i32>} : memref<64x336xf32, #tpu.memory_space<vmem>>, vector<16x208xf32>,
    %c0_7 = arith.constant 0 : index
    %c64_8 = arith.constant 64 : index
    %7 = vector.load %arg17[%c0_7, %c64_8] : memref<64x336xf32, #tpu.memory_space<vmem>>, vector<16x208xf32>
    %c0_9 = arith.constant 0 : index
    %c65 = arith.constant 65 : index
    %8 = vector.load %arg17[%c0_9, %c65] : memref<64x336xf32, #tpu.memory_space<vmem>>, vector<16x208xf32>
    %c0_10 = arith.constant 0 : index
    %c66 = arith.constant 66 : index
    %9 = vector.load %arg17[%c0_10, %c66] : memref<64x336xf32, #tpu.memory_space<vmem>>, vector<16x208xf32>
    %c0_11 = arith.constant 0 : index
    %c67 = arith.constant 67 : index
    %10 = vector.load %arg17[%c0_11, %c67] : memref<64x336xf32, #tpu.memory_space<vmem>>, vector<16x208xf32>
    %c0_12 = arith.constant 0 : index
    %c68 = arith.constant 68 : index
    %11 = vector.load %arg17[%c0_12, %c68] : memref<64x336xf32, #tpu.memory_space<vmem>>, vector<16x208xf32>
    %c0_13 = arith.constant 0 : index
    %c69 = arith.constant 69 : index
    %12 = vector.load %arg17[%c0_13, %c69] : memref<64x336xf32, #tpu.memory_space<vmem>>, vector<16x208xf32>
    %13 = tpu.concatenate %7, %8, %9, %10, %11, %12 in 0 : vector<16x208xf32>, vector<16x208xf32>, vector<16x208xf32>, vector<16x208xf32>, vector<16x208xf32>, vector<16x208xf32> -> vector<96x208xf32>
    %c0_14 = arith.constant 0 : index
    %c0_15 = arith.constant 0 : index
    %14 = vector.load %arg5[%c0_14, %c0_15] : memref<64x96xf32, #tpu.memory_space<vmem>>, vector<64x96xf32>
    %cst_16 = arith.constant dense<0.000000e+00> : vector<64x208xf32>
    %15 = tpu.matmul %14, %13, %cst_16 {dimension_numbers = #tpu.dot_dimension_numbers<[1], [0], [0], [1], [0, 0, 1, 1], [], []>} : vector<64x96xf32>, vector<96x208xf32>, vector<64x208xf32> -> vector<64x208xf32>
    %16 = vector.extract_strided_slice %15 {offsets = [0, 0], sizes = [16, 208], strides = [1, 1]} : vector<64x208xf32> to vector<16x208xf32>
    %17 = vector.extract_strided_slice %15 {offsets = [16, 0], sizes = [16, 208], strides = [1, 1]} : vector<64x208xf32> to vector<16x208xf32>
    %18 = arith.maximumf %16, %17 : vector<16x208xf32>
    %19 = vector.extract_strided_slice %15 {offsets = [32, 0], sizes = [16, 208], strides = [1, 1]} : vector<64x208xf32> to vector<16x208xf32>
    %20 = vector.extract_strided_slice %15 {offsets = [48, 0], sizes = [16, 208], strides = [1, 1]} : vector<64x208xf32> to vector<16x208xf32>
    %21 = arith.maximumf %19, %20 : vector<16x208xf32>
    %22 = arith.maximumf %18, %21 : vector<16x208xf32>
    %c0_17 = arith.constant 0 : index
    %c0_18 = arith.constant 0 : index
    %23 = vector.load %arg6[%c0_17, %c0_18] : memref<16x1xf32, #tpu.memory_space<vmem>>, vector<16x1xf32>
    %24 = vector.broadcast %23 : vector<16x1xf32> to vector<16x208xf32>
    %25 = arith.addf %22, %24 : vector<16x208xf32>
    %cst_19 = arith.constant 0.000000e+00 : f32
    %26 = vector.broadcast %cst_19 : f32 to vector<16x208xf32>
    %27 = arith.maximumf %25, %26 : vector<16x208xf32>
    %c0_20 = arith.constant 0 : index
    %c0_21 = arith.constant 0 : index
    %28 = vector.load %arg2[%c0_20, %c0_21] : memref<1x208xf32, #tpu.memory_space<vmem>>, vector<1x208xf32>
    %29 = vector.broadcast %28 : vector<1x208xf32> to vector<16x208xf32>
    %30 = arith.mulf %27, %29 : vector<16x208xf32>
    %c0_22 = arith.constant 0 : index
    %c64_23 = arith.constant 64 : index
    %31 = vector.load %arg17[%c0_22, %c64_23] : memref<64x336xf32, #tpu.memory_space<vmem>>, vector<16x208xf32>
    tpu.vector_store %arg17[%c0_22, %c64_23], %30 {strides = array<i32>} : memref<64x336xf32, #tpu.memory_space<vmem>>, vector<16x208xf32>,
    %c0_24 = arith.constant 0 : index
    %c63 = arith.constant 63 : index
    %32 = vector.load %arg17[%c0_24, %c63] : memref<64x336xf32, #tpu.memory_space<vmem>>, vector<16x208xf32>
    %c0_25 = arith.constant 0 : index
    %c65_26 = arith.constant 65 : index
    %33 = vector.load %arg17[%c0_25, %c65_26] : memref<64x336xf32, #tpu.memory_space<vmem>>, vector<16x208xf32>
    %34 = tpu.concatenate %32, %30, %33 in 0 : vector<16x208xf32>, vector<16x208xf32>, vector<16x208xf32> -> vector<48x208xf32>
    %c0_27 = arith.constant 0 : index
    %c0_28 = arith.constant 0 : index
    %35 = vector.load %arg7[%c0_27, %c0_28] : memref<16x48xf32, #tpu.memory_space<vmem>>, vector<16x48xf32>
    %cst_29 = arith.constant dense<0.000000e+00> : vector<16x208xf32>
    %36 = tpu.matmul %35, %34, %cst_29 {dimension_numbers = #tpu.dot_dimension_numbers<[1], [0], [0], [1], [0, 0, 1, 1], [], []>} : vector<16x48xf32>, vector<48x208xf32>, vector<16x208xf32> -> vector<16x208xf32>
    %c0_30 = arith.constant 0 : index
    %c64_31 = arith.constant 64 : index
    %37 = vector.load %arg17[%c0_30, %c64_31] : memref<64x336xf32, #tpu.memory_space<vmem>>, vector<16x208xf32>
    tpu.vector_store %arg17[%c0_30, %c64_31], %36 {strides = array<i32>} : memref<64x336xf32, #tpu.memory_space<vmem>>, vector<16x208xf32>,
    %c0_32 = arith.constant 0 : index
    %c65_33 = arith.constant 65 : index
    %38 = vector.load %arg17[%c0_32, %c65_33] : memref<64x336xf32, #tpu.memory_space<vmem>>, vector<16x208xf32>
    %c0_34 = arith.constant 0 : index
    %c66_35 = arith.constant 66 : index
    %39 = vector.load %arg17[%c0_34, %c66_35] : memref<64x336xf32, #tpu.memory_space<vmem>>, vector<16x208xf32>
    %c0_36 = arith.constant 0 : index
    %c67_37 = arith.constant 67 : index
    %40 = vector.load %arg17[%c0_36, %c67_37] : memref<64x336xf32, #tpu.memory_space<vmem>>, vector<16x208xf32>
    %41 = arith.maximumf %36, %38 : vector<16x208xf32>
    %42 = arith.maximumf %39, %40 : vector<16x208xf32>
    %43 = arith.maximumf %41, %42 : vector<16x208xf32>
    %c0_38 = arith.constant 0 : index
    %c0_39 = arith.constant 0 : index
    %44 = vector.load %arg8[%c0_38, %c0_39] : memref<16x1xf32, #tpu.memory_space<vmem>>, vector<16x1xf32>
    %45 = vector.broadcast %44 : vector<16x1xf32> to vector<16x208xf32>
    %46 = arith.addf %43, %45 : vector<16x208xf32>
    %cst_40 = arith.constant 0.000000e+00 : f32
    %47 = vector.broadcast %cst_40 : f32 to vector<16x208xf32>
    %48 = arith.maximumf %46, %47 : vector<16x208xf32>
    %c0_41 = arith.constant 0 : index
    %c0_42 = arith.constant 0 : index
    %49 = vector.load %arg3[%c0_41, %c0_42] : memref<1x208xf32, #tpu.memory_space<vmem>>, vector<1x208xf32>
    %50 = vector.broadcast %49 : vector<1x208xf32> to vector<16x208xf32>
    %51 = arith.mulf %48, %50 : vector<16x208xf32>
    %c0_43 = arith.constant 0 : index
    %c64_44 = arith.constant 64 : index
    %52 = vector.load %arg17[%c0_43, %c64_44] : memref<64x336xf32, #tpu.memory_space<vmem>>, vector<16x208xf32>
    tpu.vector_store %arg17[%c0_43, %c64_44], %51 {strides = array<i32>} : memref<64x336xf32, #tpu.memory_space<vmem>>, vector<16x208xf32>,
    %c0_45 = arith.constant 0 : index
    %c60 = arith.constant 60 : index
    %53 = vector.load %arg17[%c0_45, %c60] : memref<64x336xf32, #tpu.memory_space<vmem>>, vector<16x208xf32>
    %c0_46 = arith.constant 0 : index
    %c68_47 = arith.constant 68 : index
    %54 = vector.load %arg17[%c0_46, %c68_47] : memref<64x336xf32, #tpu.memory_space<vmem>>, vector<16x208xf32>
    %55 = tpu.concatenate %53, %51, %54 in 0 : vector<16x208xf32>, vector<16x208xf32>, vector<16x208xf32> -> vector<48x208xf32>
    %c0_48 = arith.constant 0 : index
    %c0_49 = arith.constant 0 : index
    %56 = vector.load %arg9[%c0_48, %c0_49] : memref<32x48xf32, #tpu.memory_space<vmem>>, vector<32x48xf32>
    %cst_50 = arith.constant dense<0.000000e+00> : vector<32x208xf32>
    %57 = tpu.matmul %56, %55, %cst_50 {dimension_numbers = #tpu.dot_dimension_numbers<[1], [0], [0], [1], [0, 0, 1, 1], [], []>} : vector<32x48xf32>, vector<48x208xf32>, vector<32x208xf32> -> vector<32x208xf32>
    %c0_51 = arith.constant 0 : index
    %c64_52 = arith.constant 64 : index
    %58 = vector.load %arg17[%c0_51, %c64_52] : memref<64x336xf32, #tpu.memory_space<vmem>>, vector<32x208xf32>
    tpu.vector_store %arg17[%c0_51, %c64_52], %57 {strides = array<i32>} : memref<64x336xf32, #tpu.memory_space<vmem>>, vector<32x208xf32>,
    %c0_53 = arith.constant 0 : index
    %c68_54 = arith.constant 68 : index
    %59 = vector.load %arg17[%c0_53, %c68_54] : memref<64x336xf32, #tpu.memory_space<vmem>>, vector<32x208xf32>
    %c0_55 = arith.constant 0 : index
    %c72 = arith.constant 72 : index
    %60 = vector.load %arg17[%c0_55, %c72] : memref<64x336xf32, #tpu.memory_space<vmem>>, vector<32x208xf32>
    %c0_56 = arith.constant 0 : index
    %c76 = arith.constant 76 : index
    %61 = vector.load %arg17[%c0_56, %c76] : memref<64x336xf32, #tpu.memory_space<vmem>>, vector<32x208xf32>
    %62 = arith.maximumf %57, %59 : vector<32x208xf32>
    %63 = arith.maximumf %60, %61 : vector<32x208xf32>
    %64 = arith.maximumf %62, %63 : vector<32x208xf32>
    %c0_57 = arith.constant 0 : index
    %c0_58 = arith.constant 0 : index
    %65 = vector.load %arg10[%c0_57, %c0_58] : memref<32x1xf32, #tpu.memory_space<vmem>>, vector<32x1xf32>
    %66 = vector.broadcast %65 : vector<32x1xf32> to vector<32x208xf32>
    %67 = arith.addf %64, %66 : vector<32x208xf32>
    %cst_59 = arith.constant 0.000000e+00 : f32
    %68 = vector.broadcast %cst_59 : f32 to vector<32x208xf32>
    %69 = arith.maximumf %67, %68 : vector<32x208xf32>
    %c0_60 = arith.constant 0 : index
    %c0_61 = arith.constant 0 : index
    %70 = vector.load %arg4[%c0_60, %c0_61] : memref<1x208xf32, #tpu.memory_space<vmem>>, vector<1x208xf32>
    %71 = vector.broadcast %70 : vector<1x208xf32> to vector<32x208xf32>
    %72 = arith.mulf %69, %71 : vector<32x208xf32>
    %c0_62 = arith.constant 0 : index
    %c64_63 = arith.constant 64 : index
    %73 = vector.load %arg17[%c0_62, %c64_63] : memref<64x336xf32, #tpu.memory_space<vmem>>, vector<32x208xf32>
    tpu.vector_store %arg17[%c0_62, %c64_63], %72 {strides = array<i32>} : memref<64x336xf32, #tpu.memory_space<vmem>>, vector<32x208xf32>,
    %c0_64 = arith.constant 0 : index
    %c48 = arith.constant 48 : index
    %74 = vector.load %arg17[%c0_64, %c48] : memref<64x336xf32, #tpu.memory_space<vmem>>, vector<32x208xf32>
    %c0_65 = arith.constant 0 : index
    %c80 = arith.constant 80 : index
    %75 = vector.load %arg17[%c0_65, %c80] : memref<64x336xf32, #tpu.memory_space<vmem>>, vector<32x208xf32>
    %76 = tpu.concatenate %74, %72, %75 in 0 : vector<32x208xf32>, vector<32x208xf32>, vector<32x208xf32> -> vector<96x208xf32>
    %c0_66 = arith.constant 0 : index
    %c0_67 = arith.constant 0 : index
    %77 = vector.load %arg11[%c0_66, %c0_67] : memref<64x96xf32, #tpu.memory_space<vmem>>, vector<64x96xf32>
    %cst_68 = arith.constant dense<0.000000e+00> : vector<64x208xf32>
    %78 = tpu.matmul %77, %76, %cst_68 {dimension_numbers = #tpu.dot_dimension_numbers<[1], [0], [0], [1], [0, 0, 1, 1], [], []>} : vector<64x96xf32>, vector<96x208xf32>, vector<64x208xf32> -> vector<64x208xf32>
    %c0_69 = arith.constant 0 : index
    %c64_70 = arith.constant 64 : index
    %79 = vector.load %arg17[%c0_69, %c64_70] : memref<64x336xf32, #tpu.memory_space<vmem>>, vector<64x208xf32>
    tpu.vector_store %arg17[%c0_69, %c64_70], %78 {strides = array<i32>} : memref<64x336xf32, #tpu.memory_space<vmem>>, vector<64x208xf32>,
    %c0_71 = arith.constant 0 : index
    %c80_72 = arith.constant 80 : index
    %80 = vector.load %arg17[%c0_71, %c80_72] : memref<64x336xf32, #tpu.memory_space<vmem>>, vector<64x208xf32>
    %c0_73 = arith.constant 0 : index
    %c96 = arith.constant 96 : index
    %81 = vector.load %arg17[%c0_73, %c96] : memref<64x336xf32, #tpu.memory_space<vmem>>, vector<64x208xf32>
    %c0_74 = arith.constant 0 : index
    %c112 = arith.constant 112 : index
    %82 = vector.load %arg17[%c0_74, %c112] : memref<64x336xf32, #tpu.memory_space<vmem>>, vector<64x208xf32>
    %83 = arith.maximumf %78, %80 : vector<64x208xf32>
    %84 = arith.maximumf %81, %82 : vector<64x208xf32>
    %85 = arith.maximumf %83, %84 : vector<64x208xf32>
    %c0_75 = arith.constant 0 : index
    %c0_76 = arith.constant 0 : index
    %86 = vector.load %arg12[%c0_75, %c0_76] : memref<64x1xf32, #tpu.memory_space<vmem>>, vector<64x1xf32>
    %87 = vector.broadcast %86 : vector<64x1xf32> to vector<64x208xf32>
    %88 = arith.addf %85, %87 : vector<64x208xf32>
    %cst_77 = arith.constant 0.000000e+00 : f32
    %89 = vector.broadcast %cst_77 : f32 to vector<64x208xf32>
    %90 = arith.maximumf %88, %89 : vector<64x208xf32>
    %c0_78 = arith.constant 0 : index
    %c0_79 = arith.constant 0 : index
    %91 = vector.load %arg13[%c0_78, %c0_79] : memref<208x1xf32, #tpu.memory_space<vmem>>, vector<208x1xf32>
    %cst_80 = arith.constant dense<0.000000e+00> : vector<64x1xf32>
    %92 = tpu.matmul %90, %91, %cst_80 {dimension_numbers = #tpu.dot_dimension_numbers<[1], [0], [0], [1], [0, 0, 1, 1], [], []>} : vector<64x208xf32>, vector<208x1xf32>, vector<64x1xf32> -> vector<64x1xf32>
    %c0_81 = arith.constant 0 : index
    %c0_82 = arith.constant 0 : index
    %93 = vector.load %arg14[%c0_81, %c0_82] : memref<6x64xf32, #tpu.memory_space<vmem>>, vector<6x64xf32>
    %cst_83 = arith.constant dense<0.000000e+00> : vector<6x1xf32>
    %94 = tpu.matmul %93, %92, %cst_83 {dimension_numbers = #tpu.dot_dimension_numbers<[1], [0], [0], [1], [0, 0, 1, 1], [], []>} : vector<6x64xf32>, vector<64x1xf32>, vector<6x1xf32> -> vector<6x1xf32>
    %c0_84 = arith.constant 0 : index
    %c0_85 = arith.constant 0 : index
    %95 = vector.load %arg15[%c0_84, %c0_85] : memref<6x1xf32, #tpu.memory_space<vmem>>, vector<6x1xf32>
    %96 = arith.addf %94, %95 : vector<6x1xf32>
    %c0_86 = arith.constant 0 : index
    %c0_87 = arith.constant 0 : index
    %c0_88 = arith.constant 0 : index
    %97 = vector.load %arg16[%c0_86, %c0_87, %c0_88] : memref<1x6x1xf32, #tpu.memory_space<vmem>>, vector<1x6x1xf32>
    %98 = vector.shape_cast %97 : vector<1x6x1xf32> to vector<6x1xf32>
    %99 = vector.shape_cast %96 : vector<6x1xf32> to vector<1x6x1xf32>
    tpu.vector_store %arg16[%c0_86, %c0_87, %c0_88], %99 {strides = array<i32>} : memref<1x6x1xf32, #tpu.memory_space<vmem>>, vector<1x6x1xf32>,
    return
  }
  func.func @transform_0(%arg0: i32) -> (i32, i32, i32) {
    %c0_i32 = arith.constant 0 : i32
    %c0_i32_0 = arith.constant 0 : i32
    %c0_i32_1 = arith.constant 0 : i32
    return %arg0, %c0_i32, %c0_i32_0 : i32, i32, i32
  }
  func.func @transform_1(%arg0: i32) -> (i32, i32) {
    %c0_i32 = arith.constant 0 : i32
    %c0_i32_0 = arith.constant 0 : i32
    %c0_i32_1 = arith.constant 0 : i32
    return %c0_i32, %c0_i32_0 : i32, i32
  }
  func.func @transform_2(%arg0: i32) -> (i32, i32) {
    %c0_i32 = arith.constant 0 : i32
    %c0_i32_0 = arith.constant 0 : i32
    %c0_i32_1 = arith.constant 0 : i32
    return %c0_i32, %c0_i32_0 : i32, i32
  }
  func.func @transform_3(%arg0: i32) -> (i32, i32) {
    %c0_i32 = arith.constant 0 : i32
    %c0_i32_0 = arith.constant 0 : i32
    %c0_i32_1 = arith.constant 0 : i32
    return %c0_i32, %c0_i32_0 : i32, i32
  }
  func.func @transform_4(%arg0: i32) -> (i32, i32) {
    %c0_i32 = arith.constant 0 : i32
    %c0_i32_0 = arith.constant 0 : i32
    %c0_i32_1 = arith.constant 0 : i32
    return %c0_i32, %c0_i32_0 : i32, i32
  }
  func.func @transform_5(%arg0: i32) -> (i32, i32) {
    %c0_i32 = arith.constant 0 : i32
    %c0_i32_0 = arith.constant 0 : i32
    %c0_i32_1 = arith.constant 0 : i32
    return %c0_i32, %c0_i32_0 : i32, i32
  }
  func.func @transform_6(%arg0: i32) -> (i32, i32) {
    %c0_i32 = arith.constant 0 : i32
    %c0_i32_0 = arith.constant 0 : i32
    %c0_i32_1 = arith.constant 0 : i32
    return %c0_i32, %c0_i32_0 : i32, i32
  }
  func.func @transform_7(%arg0: i32) -> (i32, i32) {
    %c0_i32 = arith.constant 0 : i32
    %c0_i32_0 = arith.constant 0 : i32
    %c0_i32_1 = arith.constant 0 : i32
    return %c0_i32, %c0_i32_0 : i32, i32
  }
  func.func @transform_8(%arg0: i32) -> (i32, i32) {
    %c0_i32 = arith.constant 0 : i32
    %c0_i32_0 = arith.constant 0 : i32
    %c0_i32_1 = arith.constant 0 : i32
    return %c0_i32, %c0_i32_0 : i32, i32
  }
  func.func @transform_9(%arg0: i32) -> (i32, i32) {
    %c0_i32 = arith.constant 0 : i32
    %c0_i32_0 = arith.constant 0 : i32
    %c0_i32_1 = arith.constant 0 : i32
    return %c0_i32, %c0_i32_0 : i32, i32
  }
  func.func @transform_10(%arg0: i32) -> (i32, i32) {
    %c0_i32 = arith.constant 0 : i32
    %c0_i32_0 = arith.constant 0 : i32
    %c0_i32_1 = arith.constant 0 : i32
    return %c0_i32, %c0_i32_0 : i32, i32
  }
  func.func @transform_11(%arg0: i32) -> (i32, i32) {
    %c0_i32 = arith.constant 0 : i32
    %c0_i32_0 = arith.constant 0 : i32
    %c0_i32_1 = arith.constant 0 : i32
    return %c0_i32, %c0_i32_0 : i32, i32
  }
  func.func @transform_12(%arg0: i32) -> (i32, i32) {
    %c0_i32 = arith.constant 0 : i32
    %c0_i32_0 = arith.constant 0 : i32
    %c0_i32_1 = arith.constant 0 : i32
    return %c0_i32, %c0_i32_0 : i32, i32
  }
  func.func @transform_13(%arg0: i32) -> (i32, i32) {
    %c0_i32 = arith.constant 0 : i32
    %c0_i32_0 = arith.constant 0 : i32
    %c0_i32_1 = arith.constant 0 : i32
    return %c0_i32, %c0_i32_0 : i32, i32
  }
  func.func @transform_14(%arg0: i32) -> (i32, i32) {
    %c0_i32 = arith.constant 0 : i32
    %c0_i32_0 = arith.constant 0 : i32
    %c0_i32_1 = arith.constant 0 : i32
    return %c0_i32, %c0_i32_0 : i32, i32
  }
  func.func @transform_15(%arg0: i32) -> (i32, i32, i32) {
    %c0_i32 = arith.constant 0 : i32
    %c0_i32_0 = arith.constant 0 : i32
    %c0_i32_1 = arith.constant 0 : i32
    return %arg0, %c0_i32, %c0_i32_0 : i32, i32, i32
  }
}

</mosaic_0001>

<llo_original>
// kernel: net_forward.1
$region0: #{net_forward.1}
  #allocation0 [shape = 'u32[]', space=smem, size = 0x4, offset = 0x4, fixed_abs, tag = 'smem constant byte address 0x4 - core index']
  #allocation1 [shape = 'u32[144,128]{1,0:T(1,128)}', space=vmem, size = 0x12000, scoped, tag = 'internal scratch']
  #allocation2 [shape = 'f32[64,336]{1,0:T(8,128)}', space=vmem, size = 0x18000, scoped, tag = 'scratch operand']
  %s0 = inlined_call_operand.vmem [shape: f32[2,16,208], index: 0, kind: input, shape index: {}]
  %s1 = inlined_call_operand.vmem [shape: f32[1,208], index: 1, kind: input, shape index: {}]
  %s2 = inlined_call_operand.vmem [shape: f32[1,208], index: 2, kind: input, shape index: {}]
  %s3 = inlined_call_operand.vmem [shape: f32[1,208], index: 3, kind: input, shape index: {}]
  %s4 = inlined_call_operand.vmem [shape: f32[64,96], index: 4, kind: input, shape index: {}]
  %s5 = inlined_call_operand.vmem [shape: f32[16,1], index: 5, kind: input, shape index: {}]
  %s6 = inlined_call_operand.vmem [shape: f32[16,48], index: 6, kind: input, shape index: {}]
  %s7 = inlined_call_operand.vmem [shape: f32[16,1], index: 7, kind: input, shape index: {}]
  %s8 = inlined_call_operand.vmem [shape: f32[32,48], index: 8, kind: input, shape index: {}]
  %s9 = inlined_call_operand.vmem [shape: f32[32,1], index: 9, kind: input, shape index: {}]
  %s10 = inlined_call_operand.vmem [shape: f32[64,96], index: 10, kind: input, shape index: {}]
  %s11 = inlined_call_operand.vmem [shape: f32[64,1], index: 11, kind: input, shape index: {}]
  %s12 = inlined_call_operand.vmem [shape: f32[208,1], index: 12, kind: input, shape index: {}]
  %s13 = inlined_call_operand.vmem [shape: f32[6,64], index: 13, kind: input, shape index: {}]
  %s14 = inlined_call_operand.vmem [shape: f32[6,1], index: 14, kind: input, shape index: {}]
  %s15 = inlined_call_operand.vmem [shape: f32[2,6,1], index: 15, kind: output, shape index: {}]
  %s16 = sld [smem:[#allocation0]]
  $region93: #{net_forward.1} parent=0
    _
  %s18 = ssub.s32 1, %s16
  %s19 = scalar_select 0, %s18, %s16
  loop: start=0, step=1, limit=4
  $region2: #{net_forward.1} parent=0 // loop_pre_header
    _
  $region3: #{net_forward.1} parent=0 // loop_header
    %s21 = sphi 0, %s25
    %p22 = scmp.ge.s32.totalorder %s21, 4
    %s31 = sphi 0, %s33
    %s34 = sphi 0, %s31
    %s35 = sphi 0, %s34
    %s51 = sphi 0, %s35
    %s55 = sphi 0, %s55
    %s57 = sphi 0, %s55
    %s58 = sphi 0, %s57
    %s72 = sphi 0, %s58
    %s76 = sphi 0, %s76
    %s78 = sphi 0, %s76
    %s79 = sphi 0, %s78
    %s93 = sphi 0, %s79
    %s97 = sphi 0, %s97
    %s99 = sphi 0, %s97
    %s100 = sphi 0, %s99
    %s114 = sphi 0, %s100
    %s118 = sphi 0, %s118
    %s120 = sphi 0, %s118
    %s121 = sphi 0, %s120
    %s135 = sphi 0, %s121
    %s139 = sphi 0, %s139
    %s141 = sphi 0, %s139
    %s142 = sphi 0, %s141
    %s156 = sphi 0, %s142
    %s160 = sphi 0, %s160
    %s162 = sphi 0, %s160
    %s163 = sphi 0, %s162
    %s177 = sphi 0, %s163
    %s181 = sphi 0, %s181
    %s183 = sphi 0, %s181
    %s184 = sphi 0, %s183
    %s198 = sphi 0, %s184
    %s202 = sphi 0, %s202
    %s204 = sphi 0, %s202
    %s205 = sphi 0, %s204
    %s219 = sphi 0, %s205
    %s223 = sphi 0, %s223
    %s225 = sphi 0, %s223
    %s226 = sphi 0, %s225
    %s240 = sphi 0, %s226
    %s244 = sphi 0, %s244
    %s246 = sphi 0, %s244
    %s247 = sphi 0, %s246
    %s261 = sphi 0, %s247
    %s265 = sphi 0, %s265
    %s267 = sphi 0, %s265
    %s268 = sphi 0, %s267
    %s282 = sphi 0, %s268
    %s286 = sphi 0, %s286
    %s288 = sphi 0, %s286
    %s289 = sphi 0, %s288
    %s303 = sphi 0, %s289
    %s307 = sphi 0, %s307
    %s309 = sphi 0, %s307
    %s310 = sphi 0, %s309
    %s324 = sphi 0, %s310
    %s328 = sphi 0, %s328
    %s330 = sphi 0, %s328
    %s331 = sphi 0, %s330
    %s345 = sphi 0, %s331
    %s351 = sphi 0, %s353
    %s354 = sphi 0, %s351
    %s355 = sphi 0, %s354
    %s371 = sphi 0, %s355
  $region4: #{net_forward.1} parent=0 // loop_header_branch
    %24 = sbr.rel (%p22) target = $region8
  $region5: #{net_forward.1} parent=0 // loop_body
    %s26 = ssub.s32 %s21, 1
    %s27 = ssub.s32 %s21, 2
    %s28 = sadd.s32 %s21, 1
    %s29 = ssub.s32 %s21, %s28
    %p30 = scmp.eq.s32.totalorder %s29, 0
    %s32 = sadd.s32 %s31, 1
    %s33 = scalar_select %p30, %s31, %s32
    %p36 = pneg %p30
    %p37 = scmp.eq.s32.totalorder %s21, 1
    %p38 = por %p36, %p37
    %p39 = scmp.ne.s32.totalorder %s31, %s34
    %p40 = scmp.eq.s32.totalorder %s21, 0
    %p41 = por %p39, %p40
    %p42 = scmp.ne.s32.totalorder %s31, %s34
    %p43 = scmp.eq.s32.totalorder %s26, 1
    %p44 = por %p42, %p43
    %p45 = scmp.ne.s32.totalorder %s34, %s35
    %p46 = scmp.eq.s32.totalorder %s26, 0
    %p47 = por %p45, %p46
    %p48 = scmp.ne.s32.totalorder %s34, %s35
    %p49 = scmp.eq.s32.totalorder %s27, 1
    %p50 = por %p48, %p49
    %p52 = scmp.ne.s32.totalorder %s35, %s51
    %p53 = scmp.eq.s32.totalorder %s27, 0
    %p54 = por %p52, %p53
    %s56 = sadd.s32 %s55, 1
    %p59 = scmp.eq.s32.totalorder %s21, 1
    %p60 = scmp.ne.s32.totalorder %s55, %s57
    %p61 = scmp.eq.s32.totalorder %s21, 0
    %p62 = por %p60, %p61
    %p63 = scmp.ne.s32.totalorder %s55, %s57
    %p64 = scmp.eq.s32.totalorder %s26, 1
    %p65 = por %p63, %p64
    %p66 = scmp.ne.s32.totalorder %s57, %s58
    %p67 = scmp.eq.s32.totalorder %s26, 0
    %p68 = por %p66, %p67
    %p69 = scmp.ne.s32.totalorder %s57, %s58
    %p70 = scmp.eq.s32.totalorder %s27, 1
    %p71 = por %p69, %p70
    %p73 = scmp.ne.s32.totalorder %s58, %s72
    %p74 = scmp.eq.s32.totalorder %s27, 0
    %p75 = por %p73, %p74
    %s77 = sadd.s32 %s76, 1
    %p80 = scmp.eq.s32.totalorder %s21, 1
    %p81 = scmp.ne.s32.totalorder %s76, %s78
    %p82 = scmp.eq.s32.totalorder %s21, 0
    %p83 = por %p81, %p82
    %p84 = scmp.ne.s32.totalorder %s76, %s78
    %p85 = scmp.eq.s32.totalorder %s26, 1
    %p86 = por %p84, %p85
    %p87 = scmp.ne.s32.totalorder %s78, %s79
    %p88 = scmp.eq.s32.totalorder %s26, 0
    %p89 = por %p87, %p88
    %p90 = scmp.ne.s32.totalorder %s78, %s79
    %p91 = scmp.eq.s32.totalorder %s27, 1
    %p92 = por %p90, %p91
    %p94 = scmp.ne.s32.totalorder %s79, %s93
    %p95 = scmp.eq.s32.totalorder %s27, 0
    %p96 = por %p94, %p95
    %s98 = sadd.s32 %s97, 1
    %p101 = scmp.eq.s32.totalorder %s21, 1
    %p102 = scmp.ne.s32.totalorder %s97, %s99
    %p103 = scmp.eq.s32.totalorder %s21, 0
    %p104 = por %p102, %p103
    %p105 = scmp.ne.s32.totalorder %s97, %s99
    %p106 = scmp.eq.s32.totalorder %s26, 1
    %p107 = por %p105, %p106
    %p108 = scmp.ne.s32.totalorder %s99, %s100
    %p109 = scmp.eq.s32.totalorder %s26, 0
    %p110 = por %p108, %p109
    %p111 = scmp.ne.s32.totalorder %s99, %s100
    %p112 = scmp.eq.s32.totalorder %s27, 1
    %p113 = por %p111, %p112
    %p115 = scmp.ne.s32.totalorder %s100, %s114
    %p116 = scmp.eq.s32.totalorder %s27, 0
    %p117 = por %p115, %p116
    %s119 = sadd.s32 %s118, 1
    %p122 = scmp.eq.s32.totalorder %s21, 1
    %p123 = scmp.ne.s32.totalorder %s118, %s120
    %p124 = scmp.eq.s32.totalorder %s21, 0
    %p125 = por %p123, %p124
    %p126 = scmp.ne.s32.totalorder %s118, %s120
    %p127 = scmp.eq.s32.totalorder %s26, 1
    %p128 = por %p126, %p127
    %p129 = scmp.ne.s32.totalorder %s120, %s121
    %p130 = scmp.eq.s32.totalorder %s26, 0
    %p131 = por %p129, %p130
    %p132 = scmp.ne.s32.totalorder %s120, %s121
    %p133 = scmp.eq.s32.totalorder %s27, 1
    %p134 = por %p132, %p133
    %p136 = scmp.ne.s32.totalorder %s121, %s135
    %p137 = scmp.eq.s32.totalorder %s27, 0
    %p138 = por %p136, %p137
    %s140 = sadd.s32 %s139, 1
    %p143 = scmp.eq.s32.totalorder %s21, 1
    %p144 = scmp.ne.s32.totalorder %s139, %s141
    %p145 = scmp.eq.s32.totalorder %s21, 0
    %p146 = por %p144, %p145
    %p147 = scmp.ne.s32.totalorder %s139, %s141
    %p148 = scmp.eq.s32.totalorder %s26, 1
    %p149 = por %p147, %p148
    %p150 = scmp.ne.s32.totalorder %s141, %s142
    %p151 = scmp.eq.s32.totalorder %s26, 0
    %p152 = por %p150, %p151
    %p153 = scmp.ne.s32.totalorder %s141, %s142
    %p154 = scmp.eq.s32.totalorder %s27, 1
    %p155 = por %p153, %p154
    %p157 = scmp.ne.s32.totalorder %s142, %s156
    %p158 = scmp.eq.s32.totalorder %s27, 0
    %p159 = por %p157, %p158
    %s161 = sadd.s32 %s160, 1
    %p164 = scmp.eq.s32.totalorder %s21, 1
    %p165 = scmp.ne.s32.totalorder %s160, %s162
    %p166 = scmp.eq.s32.totalorder %s21, 0
    %p167 = por %p165, %p166
    %p168 = scmp.ne.s32.totalorder %s160, %s162
    %p169 = scmp.eq.s32.totalorder %s26, 1
    %p170 = por %p168, %p169
    %p171 = scmp.ne.s32.totalorder %s162, %s163
    %p172 = scmp.eq.s32.totalorder %s26, 0
    %p173 = por %p171, %p172
    %p174 = scmp.ne.s32.totalorder %s162, %s163
    %p175 = scmp.eq.s32.totalorder %s27, 1
    %p176 = por %p174, %p175
    %p178 = scmp.ne.s32.totalorder %s163, %s177
    %p179 = scmp.eq.s32.totalorder %s27, 0
    %p180 = por %p178, %p179
    %s182 = sadd.s32 %s181, 1
    %p185 = scmp.eq.s32.totalorder %s21, 1
    %p186 = scmp.ne.s32.totalorder %s181, %s183
    %p187 = scmp.eq.s32.totalorder %s21, 0
    %p188 = por %p186, %p187
    %p189 = scmp.ne.s32.totalorder %s181, %s183
    %p190 = scmp.eq.s32.totalorder %s26, 1
    %p191 = por %p189, %p190
    %p192 = scmp.ne.s32.totalorder %s183, %s184
    %p193 = scmp.eq.s32.totalorder %s26, 0
    %p194 = por %p192, %p193
    %p195 = scmp.ne.s32.totalorder %s183, %s184
    %p196 = scmp.eq.s32.totalorder %s27, 1
    %p197 = por %p195, %p196
    %p199 = scmp.ne.s32.totalorder %s184, %s198
    %p200 = scmp.eq.s32.totalorder %s27, 0
    %p201 = por %p199, %p200
    %s203 = sadd.s32 %s202, 1
    %p206 = scmp.eq.s32.totalorder %s21, 1
    %p207 = scmp.ne.s32.totalorder %s202, %s204
    %p208 = scmp.eq.s32.totalorder %s21, 0
    %p209 = por %p207, %p208
    %p210 = scmp.ne.s32.totalorder %s202, %s204
    %p211 = scmp.eq.s32.totalorder %s26, 1
    %p212 = por %p210, %p211
    %p213 = scmp.ne.s32.totalorder %s204, %s205
    %p214 = scmp.eq.s32.totalorder %s26, 0
    %p215 = por %p213, %p214
    %p216 = scmp.ne.s32.totalorder %s204, %s205
    %p217 = scmp.eq.s32.totalorder %s27, 1
    %p218 = por %p216, %p217
    %p220 = scmp.ne.s32.totalorder %s205, %s219
    %p221 = scmp.eq.s32.totalorder %s27, 0
    %p222 = por %p220, %p221
    %s224 = sadd.s32 %s223, 1
    %p227 = scmp.eq.s32.totalorder %s21, 1
    %p228 = scmp.ne.s32.totalorder %s223, %s225
    %p229 = scmp.eq.s32.totalorder %s21, 0
    %p230 = por %p228, %p229
    %p231 = scmp.ne.s32.totalorder %s223, %s225
    %p232 = scmp.eq.s32.totalorder %s26, 1
    %p233 = por %p231, %p232
    %p234 = scmp.ne.s32.totalorder %s225, %s226
    %p235 = scmp.eq.s32.totalorder %s26, 0
    %p236 = por %p234, %p235
    %p237 = scmp.ne.s32.totalorder %s225, %s226
    %p238 = scmp.eq.s32.totalorder %s27, 1
    %p239 = por %p237, %p238
    %p241 = scmp.ne.s32.totalorder %s226, %s240
    %p242 = scmp.eq.s32.totalorder %s27, 0
    %p243 = por %p241, %p242
    %s245 = sadd.s32 %s244, 1
    %p248 = scmp.eq.s32.totalorder %s21, 1
    %p249 = scmp.ne.s32.totalorder %s244, %s246
    %p250 = scmp.eq.s32.totalorder %s21, 0
    %p251 = por %p249, %p250
    %p252 = scmp.ne.s32.totalorder %s244, %s246
    %p253 = scmp.eq.s32.totalorder %s26, 1
    %p254 = por %p252, %p253
    %p255 = scmp.ne.s32.totalorder %s246, %s247
    %p256 = scmp.eq.s32.totalorder %s26, 0
    %p257 = por %p255, %p256
    %p258 = scmp.ne.s32.totalorder %s246, %s247
    %p259 = scmp.eq.s32.totalorder %s27, 1
    %p260 = por %p258, %p259
    %p262 = scmp.ne.s32.totalorder %s247, %s261
    %p263 = scmp.eq.s32.totalorder %s27, 0
    %p264 = por %p262, %p263
    %s266 = sadd.s32 %s265, 1
    %p269 = scmp.eq.s32.totalorder %s21, 1
    %p270 = scmp.ne.s32.totalorder %s265, %s267
    %p271 = scmp.eq.s32.totalorder %s21, 0
    %p272 = por %p270, %p271
    %p273 = scmp.ne.s32.totalorder %s265, %s267
    %p274 = scmp.eq.s32.totalorder %s26, 1
    %p275 = por %p273, %p274
    %p276 = scmp.ne.s32.totalorder %s267, %s268
    %p277 = scmp.eq.s32.totalorder %s26, 0
    %p278 = por %p276, %p277
    %p279 = scmp.ne.s32.totalorder %s267, %s268
    %p280 = scmp.eq.s32.totalorder %s27, 1
    %p281 = por %p279, %p280
    %p283 = scmp.ne.s32.totalorder %s268, %s282
    %p284 = scmp.eq.s32.totalorder %s27, 0
    %p285 = por %p283, %p284
    %s287 = sadd.s32 %s286, 1
    %p290 = scmp.eq.s32.totalorder %s21, 1
    %p291 = scmp.ne.s32.totalorder %s286, %s288
    %p292 = scmp.eq.s32.totalorder %s21, 0
    %p293 = por %p291, %p292
    %p294 = scmp.ne.s32.totalorder %s286, %s288
    %p295 = scmp.eq.s32.totalorder %s26, 1
    %p296 = por %p294, %p295
    %p297 = scmp.ne.s32.totalorder %s288, %s289
    %p298 = scmp.eq.s32.totalorder %s26, 0
    %p299 = por %p297, %p298
    %p300 = scmp.ne.s32.totalorder %s288, %s289
    %p301 = scmp.eq.s32.totalorder %s27, 1
    %p302 = por %p300, %p301
    %p304 = scmp.ne.s32.totalorder %s289, %s303
    %p305 = scmp.eq.s32.totalorder %s27, 0
    %p306 = por %p304, %p305
    %s308 = sadd.s32 %s307, 1
    %p311 = scmp.eq.s32.totalorder %s21, 1
    %p312 = scmp.ne.s32.totalorder %s307, %s309
    %p313 = scmp.eq.s32.totalorder %s21, 0
    %p314 = por %p312, %p313
    %p315 = scmp.ne.s32.totalorder %s307, %s309
    %p316 = scmp.eq.s32.totalorder %s26, 1
    %p317 = por %p315, %p316
    %p318 = scmp.ne.s32.totalorder %s309, %s310
    %p319 = scmp.eq.s32.totalorder %s26, 0
    %p320 = por %p318, %p319
    %p321 = scmp.ne.s32.totalorder %s309, %s310
    %p322 = scmp.eq.s32.totalorder %s27, 1
    %p323 = por %p321, %p322
    %p325 = scmp.ne.s32.totalorder %s310, %s324
    %p326 = scmp.eq.s32.totalorder %s27, 0
    %p327 = por %p325, %p326
    %s329 = sadd.s32 %s328, 1
    %p332 = scmp.eq.s32.totalorder %s21, 1
    %p333 = scmp.ne.s32.totalorder %s328, %s330
    %p334 = scmp.eq.s32.totalorder %s21, 0
    %p335 = por %p333, %p334
    %p336 = scmp.ne.s32.totalorder %s328, %s330
    %p337 = scmp.eq.s32.totalorder %s26, 1
    %p338 = por %p336, %p337
    %p339 = scmp.ne.s32.totalorder %s330, %s331
    %p340 = scmp.eq.s32.totalorder %s26, 0
    %p341 = por %p339, %p340
    %p342 = scmp.ne.s32.totalorder %s330, %s331
    %p343 = scmp.eq.s32.totalorder %s27, 1
    %p344 = por %p342, %p343
    %p346 = scmp.ne.s32.totalorder %s331, %s345
    %p347 = scmp.eq.s32.totalorder %s27, 0
    %p348 = por %p346, %p347
    %s349 = ssub.s32 %s21, %s28
    %p350 = scmp.eq.s32.totalorder %s349, 0
    %s352 = sadd.s32 %s351, 1
    %s353 = scalar_select %p350, %s351, %s352
    %p356 = pneg %p350
    %p357 = scmp.eq.s32.totalorder %s21, 1
    %p358 = por %p356, %p357
    %p359 = scmp.ne.s32.totalorder %s351, %s354
    %p360 = scmp.eq.s32.totalorder %s21, 0
    %p361 = por %p359, %p360
    %p362 = scmp.ne.s32.totalorder %s351, %s354
    %p363 = scmp.eq.s32.totalorder %s26, 1
    %p364 = por %p362, %p363
    %p365 = scmp.ne.s32.totalorder %s354, %s355
    %p366 = scmp.eq.s32.totalorder %s26, 0
    %p367 = por %p365, %p366
    %p368 = scmp.ne.s32.totalorder %s354, %s355
    %p369 = scmp.eq.s32.totalorder %s27, 1
    %p370 = por %p368, %p369
    %p372 = scmp.ne.s32.totalorder %s355, %s371
    %p373 = scmp.eq.s32.totalorder %s27, 0
    %p374 = por %p372, %p373
    %p375 = scmp.le.s32.totalorder 1, %s21
    %p376 = scmp.lt.s32.totalorder %s21, 3
    %p377 = pnand %p375, %p376
    %p378 = pneg %p377
    // Predicated region
    $region9: #{net_forward.1} parent=5 // pred_check
      _
    $region10: #{net_forward.1} parent=5 // pred_check_branch
      %380 = sbr.rel (%p377) target = $region12
    $region11: #{net_forward.1} parent=5 // pred_region
      %s381 = ssub.s32 %s21, 1
      // Predicated region
      $region13: #{net_forward.1} parent=11 // pred_check
        %p382 = pneg %p68
      $region14: #{net_forward.1} parent=11 // pred_check_branch
        %384 = sbr.rel (%p382) target = $region16
      $region15: #{net_forward.1} parent=11 // pred_region
        _
      $region16: #{net_forward.1} parent=11 // pred_fallthru
        _
      // Predicated region
      $region17: #{net_forward.1} parent=11 // pred_check
        %p385 = pneg %p89
      $region18: #{net_forward.1} parent=11 // pred_check_branch
        %387 = sbr.rel (%p385) target = $region20
      $region19: #{net_forward.1} parent=11 // pred_region
        _
      $region20: #{net_forward.1} parent=11 // pred_fallthru
        _
      // Predicated region
      $region21: #{net_forward.1} parent=11 // pred_check
        %p388 = pneg %p110
      $region22: #{net_forward.1} parent=11 // pred_check_branch
        %390 = sbr.rel (%p388) target = $region24
      $region23: #{net_forward.1} parent=11 // pred_region
        _
      $region24: #{net_forward.1} parent=11 // pred_fallthru
        _
      // Predicated region
      $region25: #{net_forward.1} parent=11 // pred_check
        %p391 = pneg %p131
      $region26: #{net_forward.1} parent=11 // pred_check_branch
        %393 = sbr.rel (%p391) target = $region28
      $region27: #{net_forward.1} parent=11 // pred_region
        _
      $region28: #{net_forward.1} parent=11 // pred_fallthru
        _
      // Predicated region
      $region29: #{net_forward.1} parent=11 // pred_check
        %p394 = pneg %p152
      $region30: #{net_forward.1} parent=11 // pred_check_branch
        %396 = sbr.rel (%p394) target = $region32
      $region31: #{net_forward.1} parent=11 // pred_region
        _
      $region32: #{net_forward.1} parent=11 // pred_fallthru
        _
      // Predicated region
      $region33: #{net_forward.1} parent=11 // pred_check
        %p397 = pneg %p173
      $region34: #{net_forward.1} parent=11 // pred_check_branch
        %399 = sbr.rel (%p397) target = $region36
      $region35: #{net_forward.1} parent=11 // pred_region
        _
      $region36: #{net_forward.1} parent=11 // pred_fallthru
        _
      // Predicated region
      $region37: #{net_forward.1} parent=11 // pred_check
        %p400 = pneg %p194
      $region38: #{net_forward.1} parent=11 // pred_check_branch
        %402 = sbr.rel (%p400) target = $region40
      $region39: #{net_forward.1} parent=11 // pred_region
        _
      $region40: #{net_forward.1} parent=11 // pred_fallthru
        _
      // Predicated region
      $region41: #{net_forward.1} parent=11 // pred_check
        %p403 = pneg %p215
      $region42: #{net_forward.1} parent=11 // pred_check_branch
        %405 = sbr.rel (%p403) target = $region44
      $region43: #{net_forward.1} parent=11 // pred_region
        _
      $region44: #{net_forward.1} parent=11 // pred_fallthru
        _
      // Predicated region
      $region45: #{net_forward.1} parent=11 // pred_check
        %p406 = pneg %p236
      $region46: #{net_forward.1} parent=11 // pred_check_branch
        %408 = sbr.rel (%p406) target = $region48
      $region47: #{net_forward.1} parent=11 // pred_region
        _
      $region48: #{net_forward.1} parent=11 // pred_fallthru
        _
      // Predicated region
      $region49: #{net_forward.1} parent=11 // pred_check
        %p409 = pneg %p257
      $region50: #{net_forward.1} parent=11 // pred_check_branch
        %411 = sbr.rel (%p409) target = $region52
      $region51: #{net_forward.1} parent=11 // pred_region
        _
      $region52: #{net_forward.1} parent=11 // pred_fallthru
        _
      // Predicated region
      $region53: #{net_forward.1} parent=11 // pred_check
        %p412 = pneg %p278
      $region54: #{net_forward.1} parent=11 // pred_check_branch
        %414 = sbr.rel (%p412) target = $region56
      $region55: #{net_forward.1} parent=11 // pred_region
        _
      $region56: #{net_forward.1} parent=11 // pred_fallthru
        _
      // Predicated region
      $region57: #{net_forward.1} parent=11 // pred_check
        %p415 = pneg %p299
      $region58: #{net_forward.1} parent=11 // pred_check_branch
        %417 = sbr.rel (%p415) target = $region60
      $region59: #{net_forward.1} parent=11 // pred_region
        _
      $region60: #{net_forward.1} parent=11 // pred_fallthru
        _
      // Predicated region
      $region61: #{net_forward.1} parent=11 // pred_check
        %p418 = pneg %p320
      $region62: #{net_forward.1} parent=11 // pred_check_branch
        %420 = sbr.rel (%p418) target = $region64
      $region63: #{net_forward.1} parent=11 // pred_region
        _
      $region64: #{net_forward.1} parent=11 // pred_fallthru
        _
      // Predicated region
      $region65: #{net_forward.1} parent=11 // pred_check
        %p421 = pneg %p341
      $region66: #{net_forward.1} parent=11 // pred_check_branch
        %423 = sbr.rel (%p421) target = $region68
      $region67: #{net_forward.1} parent=11 // pred_region
        _
      $region68: #{net_forward.1} parent=11 // pred_fallthru
        _
    $region12: #{net_forward.1} parent=5 // pred_fallthru
      _
    %p424 = scmp.lt.s32.totalorder %s21, 2
    // Predicated region
    $region69: #{net_forward.1} parent=5 // pred_check
      %p425 = pneg %p424
    $region70: #{net_forward.1} parent=5 // pred_check_branch
      %427 = sbr.rel (%p425) target = $region72
    $region71: #{net_forward.1} parent=5 // pred_region
      // Predicated region
      $region73: #{net_forward.1} parent=71 // pred_check
        %p428 = pneg %p41
      $region74: #{net_forward.1} parent=71 // pred_check_branch
        %430 = sbr.rel (%p428) target = $region76
      $region75: #{net_forward.1} parent=71 // pred_region
        %p431 = scmp.lt.s32.totalorder %s21, 1
        %s432 = scalar_select %p431, %s21, 1
        %s433 = smul.addr %s432, 4
        %s434 = smul.addr %s433, 8
        %s435 = scalar_lea.vmem %s0, %s434
      $region76: #{net_forward.1} parent=71 // pred_fallthru
        _
    $region72: #{net_forward.1} parent=5 // pred_fallthru
      _
    %p436 = scmp.le.s32.totalorder 1, %s21
    %p437 = scmp.lt.s32.totalorder %s21, 3
    %p438 = pnand %p436, %p437
    %p439 = pneg %p438
    // Predicated region
    $region77: #{net_forward.1} parent=5 // pred_check
      _
    $region78: #{net_forward.1} parent=5 // pred_check_branch
      %441 = sbr.rel (%p438) target = $region80
    $region79: #{net_forward.1} parent=5 // pred_region
      %s442 = ssub.s32 %s21, 1
      %p443 = scmp.lt.s32.totalorder %s26, 1
      %s444 = scalar_select %p443, %s26, 1
      %s445 = smul.addr %s444, 4
      %s446 = smul.addr %s445, 8
      %s447 = scalar_lea.vmem %s0, %s446
      %p448 = pneg %p47
      %p449 = pneg %p44
      %p450 = pneg %p68
      %p451 = pneg %p65
      %p452 = pneg %p89
      %p453 = pneg %p86
      %p454 = pneg %p110
      %p455 = pneg %p107
      %p456 = pneg %p131
      %p457 = pneg %p128
      %p458 = pneg %p152
      %p459 = pneg %p149
      %p460 = pneg %p173
      %p461 = pneg %p170
      %p462 = pneg %p194
      %p463 = pneg %p191
      %p464 = pneg %p215
      %p465 = pneg %p212
      %p466 = pneg %p236
      %p467 = pneg %p233
      %p468 = pneg %p257
      %p469 = pneg %p254
      %p470 = pneg %p278
      %p471 = pneg %p275
      %p472 = pneg %p299
      %p473 = pneg %p296
      %p474 = pneg %p320
      %p475 = pneg %p317
      %p476 = pneg %p341
      %p477 = pneg %p338
      %p478 = pneg %p367
      %p479 = pneg %p364
      %p480 = scmp.lt.s32.totalorder %s26, 1
      %s481 = scalar_select %p480, %s26, 1
      %s482 = smul.addr %s481, 8
      %s483 = scalar_lea.vmem %s15, %s482
      %p484 = scmp.lt.s32.totalorder %s26, 1
      %s485 = scalar_select %p484, %s26, 1
      %s486 = smul.addr %s485, 4
      %s487 = smul.addr %s486, 8
      %s488 = scalar_lea.vmem %s0, %s487
      %p489 = scmp.lt.s32.totalorder %s26, 1
      %s490 = scalar_select %p489, %s26, 1
      %s491 = smul.addr %s490, 8
      %s492 = scalar_lea.vmem %s15, %s491
      %vm493 = vcmask 523264
      %494 = vst.msk [vmem:[#allocation2] sm:$0xff] %vm493, 0.0
      %495 = vst.msk [vmem:[#allocation2 + $0x18] sm:$0xff] %vm493, 0.0
      %496 = vst.msk [vmem:[#allocation2 + $0x30] sm:$0xff] %vm493, 0.0
      %497 = vst.msk [vmem:[#allocation2 + $0x48] sm:$0xff] %vm493, 0.0
      %498 = vst.msk [vmem:[#allocation2 + $0x60] sm:$0xff] %vm493, 0.0
      %499 = vst.msk [vmem:[#allocation2 + $0x78] sm:$0xff] %vm493, 0.0
      %500 = vst.msk [vmem:[#allocation2 + $0x90] sm:$0xff] %vm493, 0.0
      %501 = vst.msk [vmem:[#allocation2 + $0xa8] sm:$0xff] %vm493, 0.0
      %vm502 = vcmask 654464
      %503 = vst.msk [vmem:[#allocation2 + $0x10] sm:$0xff] %vm502, 0.0
      %504 = vst.msk [vmem:[#allocation2 + $0x28] sm:$0xff] %vm502, 0.0
      %505 = vst.msk [vmem:[#allocation2 + $0x40] sm:$0xff] %vm502, 0.0
      %506 = vst.msk [vmem:[#allocation2 + $0x58] sm:$0xff] %vm502, 0.0
      %507 = vst.msk [vmem:[#allocation2 + $0x70] sm:$0xff] %vm502, 0.0
      %508 = vst.msk [vmem:[#allocation2 + $0x88] sm:$0xff] %vm502, 0.0
      %509 = vst.msk [vmem:[#allocation2 + $0xa0] sm:$0xff] %vm502, 0.0
      %510 = vst.msk [vmem:[#allocation2 + $0xb8] sm:$0xff] %vm502, 0.0
      %v511 = vld [vmem:[%s488] sm:$0xff]
      %v512 = vld [vmem:[%s488 + $0x8] sm:$0xff]
      %v513 = vld [vmem:[%s488 + $0x10] sm:$0xff]
      %v514 = vld [vmem:[%s488 + $0x18] sm:$0xff]
      %519 = vrot.lane.b32.xlu0 %v511, 64
      %v520 = vpop.permute.xlu0 %519
      %521 = vrot.lane.b32.xlu0 %v512, 64
      %v522 = vpop.permute.xlu0 %521
      %523 = vrot.lane.b32.xlu0 %v513, 64
      %v524 = vpop.permute.xlu0 %523
      %525 = vrot.lane.b32.xlu0 %v514, 64
      %v526 = vpop.permute.xlu0 %525
      %v527 = vsel %vm493, %v520, %v522
      %v528 = vsel %vm493, %v524, %v526
      %vm535 = vcmask 1048064
      %536 = vst.msk [vmem:[#allocation2] sm:$0xff] %vm535, %v520
      %537 = vst [vmem:[#allocation2 + $0x8] sm:$0xff] %v527
      %vm538 = vcmask 130048
      %539 = vst.msk [vmem:[#allocation2 + $0x10] sm:$0xff] %vm538, %v522
      %540 = vst.msk [vmem:[#allocation2 + $0x18] sm:$0xff] %vm535, %v524
      %541 = vst [vmem:[#allocation2 + $0x20] sm:$0xff] %v528
      %542 = vst.msk [vmem:[#allocation2 + $0x28] sm:$0xff] %vm538, %v526
      %v543 = vld [vmem:[#allocation2] sm:$0xff]
      %v544 = vld [vmem:[#allocation2 + $0x8] sm:$0xff]
      %v545 = vld [vmem:[#allocation2 + $0x10] sm:$0xff]
      %v546 = vld [vmem:[#allocation2 + $0x18] sm:$0xff]
      %v547 = vld [vmem:[#allocation2 + $0x20] sm:$0xff]
      %v548 = vld [vmem:[#allocation2 + $0x28] sm:$0xff]
      %555 = vrot.lane.b32.xlu0 %v543, 127
      %v556 = vpop.permute.xlu0 %555
      %557 = vrot.lane.b32.xlu0 %v544, 127
      %v558 = vpop.permute.xlu0 %557
      %559 = vrot.lane.b32.xlu0 %v545, 127
      %v560 = vpop.permute.xlu0 %559
      %561 = vrot.lane.b32.xlu0 %v546, 127
      %v562 = vpop.permute.xlu0 %561
      %563 = vrot.lane.b32.xlu0 %v547, 127
      %v564 = vpop.permute.xlu0 %563
      %565 = vrot.lane.b32.xlu0 %v548, 127
      %v566 = vpop.permute.xlu0 %565
      %vm567 = vcmask 1039360
      %v568 = vsel %vm567, %v556, %v558
      %v569 = vsel %vm567, %v558, %v560
      %v570 = vsel %vm567, %v562, %v564
      %v571 = vsel %vm567, %v564, %v566
      %572 = vrot.lane.b32.xlu0 %v543, 126
      %v573 = vpop.permute.xlu0 %572
      %574 = vrot.lane.b32.xlu0 %v544, 126
      %v575 = vpop.permute.xlu0 %574
      %576 = vrot.lane.b32.xlu0 %v545, 126
      %v577 = vpop.permute.xlu0 %576
      %578 = vrot.lane.b32.xlu0 %v546, 126
      %v579 = vpop.permute.xlu0 %578
      %580 = vrot.lane.b32.xlu0 %v547, 126
      %v581 = vpop.permute.xlu0 %580
      %582 = vrot.lane.b32.xlu0 %v548, 126
      %v583 = vpop.permute.xlu0 %582
      %vm584 = vcmask 1031168
      %v585 = vsel %vm584, %v573, %v575
      %v586 = vsel %vm584, %v575, %v577
      %v587 = vsel %vm584, %v579, %v581
      %v588 = vsel %vm584, %v581, %v583
      %589 = vrot.lane.b32.xlu0 %v543, 125
      %v590 = vpop.permute.xlu0 %589
      %591 = vrot.lane.b32.xlu0 %v544, 125
      %v592 = vpop.permute.xlu0 %591
      %593 = vrot.lane.b32.xlu0 %v545, 125
      %v594 = vpop.permute.xlu0 %593
      %595 = vrot.lane.b32.xlu0 %v546, 125
      %v596 = vpop.permute.xlu0 %595
      %597 = vrot.lane.b32.xlu0 %v547, 125
      %v598 = vpop.permute.xlu0 %597
      %599 = vrot.lane.b32.xlu0 %v548, 125
      %v600 = vpop.permute.xlu0 %599
      %vm601 = vcmask 1022976
      %v602 = vsel %vm601, %v590, %v592
      %v603 = vsel %vm601, %v592, %v594
      %v604 = vsel %vm601, %v596, %v598
      %v605 = vsel %vm601, %v598, %v600
      %606 = vrot.lane.b32.xlu0 %v543, 124
      %v607 = vpop.permute.xlu0 %606
      %608 = vrot.lane.b32.xlu0 %v544, 124
      %v609 = vpop.permute.xlu0 %608
      %610 = vrot.lane.b32.xlu0 %v545, 124
      %v611 = vpop.permute.xlu0 %610
      %612 = vrot.lane.b32.xlu0 %v546, 124
      %v613 = vpop.permute.xlu0 %612
      %614 = vrot.lane.b32.xlu0 %v547, 124
      %v615 = vpop.permute.xlu0 %614
      %616 = vrot.lane.b32.xlu0 %v548, 124
      %v617 = vpop.permute.xlu0 %616
      %vm618 = vcmask 1014784
      %v619 = vsel %vm618, %v607, %v609
      %v620 = vsel %vm618, %v609, %v611
      %v621 = vsel %vm618, %v613, %v615
      %v622 = vsel %vm618, %v615, %v617
      %623 = vrot.lane.b32.xlu0 %v543, 123
      %v624 = vpop.permute.xlu0 %623
      %625 = vrot.lane.b32.xlu0 %v544, 123
      %v626 = vpop.permute.xlu0 %625
      %627 = vrot.lane.b32.xlu0 %v545, 123
      %v628 = vpop.permute.xlu0 %627
      %629 = vrot.lane.b32.xlu0 %v546, 123
      %v630 = vpop.permute.xlu0 %629
      %631 = vrot.lane.b32.xlu0 %v547, 123
      %v632 = vpop.permute.xlu0 %631
      %633 = vrot.lane.b32.xlu0 %v548, 123
      %v634 = vpop.permute.xlu0 %633
      %vm635 = vcmask 1006592
      %v636 = vsel %vm635, %v624, %v626
      %v637 = vsel %vm635, %v626, %v628
      %v638 = vsel %vm635, %v630, %v632
      %v639 = vsel %vm635, %v632, %v634
      %v640 = vld [vmem:[%s4] sm:$0xff]
      %v641 = vld [vmem:[%s4 + $0x8] sm:$0xff]
      %v642 = vld [vmem:[%s4 + $0x10] sm:$0xff]
      %v643 = vld [vmem:[%s4 + $0x18] sm:$0xff]
      %v644 = vld [vmem:[%s4 + $0x20] sm:$0xff]
      %v645 = vld [vmem:[%s4 + $0x28] sm:$0xff]
      %v646 = vld [vmem:[%s4 + $0x30] sm:$0xff]
      %v647 = vld [vmem:[%s4 + $0x38] sm:$0xff]
      %648 = vrot.lane.b32.xlu0 %v543, 64
      %v649 = vpop.permute.xlu0 %648
      %650 = vrot.lane.b32.xlu0 %v544, 64
      %v651 = vpop.permute.xlu0 %650
      %652 = vrot.lane.b32.xlu0 %v545, 64
      %v653 = vpop.permute.xlu0 %652
      %654 = vrot.lane.b32.xlu0 %v546, 64
      %v655 = vpop.permute.xlu0 %654
      %656 = vrot.lane.b32.xlu0 %v547, 64
      %v657 = vpop.permute.xlu0 %656
      %658 = vrot.lane.b32.xlu0 %v548, 64
      %v659 = vpop.permute.xlu0 %658
      %660 = vrot.lane.b32.xlu0 %v568, 64
      %v661 = vpop.permute.xlu0 %660
      %662 = vrot.lane.b32.xlu0 %v569, 64
      %v663 = vpop.permute.xlu0 %662
      %664 = vrot.lane.b32.xlu0 %v560, 64
      %v665 = vpop.permute.xlu0 %664
      %666 = vrot.lane.b32.xlu0 %v570, 64
      %v667 = vpop.permute.xlu0 %666
      %668 = vrot.lane.b32.xlu0 %v571, 64
      %v669 = vpop.permute.xlu0 %668
      %670 = vrot.lane.b32.xlu0 %v566, 64
      %v671 = vpop.permute.xlu0 %670
      %672 = vrot.lane.b32.xlu0 %v585, 64
      %v673 = vpop.permute.xlu0 %672
      %674 = vrot.lane.b32.xlu0 %v586, 64
      %v675 = vpop.permute.xlu0 %674
      %676 = vrot.lane.b32.xlu0 %v577, 64
      %v677 = vpop.permute.xlu0 %676
      %678 = vrot.lane.b32.xlu0 %v587, 64
      %v679 = vpop.permute.xlu0 %678
      %680 = vrot.lane.b32.xlu0 %v588, 64
      %v681 = vpop.permute.xlu0 %680
      %682 = vrot.lane.b32.xlu0 %v583, 64
      %v683 = vpop.permute.xlu0 %682
      %684 = vrot.lane.b32.xlu0 %v602, 64
      %v685 = vpop.permute.xlu0 %684
      %686 = vrot.lane.b32.xlu0 %v603, 64
      %v687 = vpop.permute.xlu0 %686
      %688 = vrot.lane.b32.xlu0 %v594, 64
      %v689 = vpop.permute.xlu0 %688
      %690 = vrot.lane.b32.xlu0 %v604, 64
      %v691 = vpop.permute.xlu0 %690
      %692 = vrot.lane.b32.xlu0 %v605, 64
      %v693 = vpop.permute.xlu0 %692
      %694 = vrot.lane.b32.xlu0 %v600, 64
      %v695 = vpop.permute.xlu0 %694
      %696 = vrot.lane.b32.xlu0 %v619, 64
      %v697 = vpop.permute.xlu0 %696
      %698 = vrot.lane.b32.xlu0 %v620, 64
      %v699 = vpop.permute.xlu0 %698
      %700 = vrot.lane.b32.xlu0 %v611, 64
      %v701 = vpop.permute.xlu0 %700
      %702 = vrot.lane.b32.xlu0 %v621, 64
      %v703 = vpop.permute.xlu0 %702
      %704 = vrot.lane.b32.xlu0 %v622, 64
      %v705 = vpop.permute.xlu0 %704
      %706 = vrot.lane.b32.xlu0 %v617, 64
      %v707 = vpop.permute.xlu0 %706
      %708 = vrot.lane.b32.xlu0 %v636, 64
      %v709 = vpop.permute.xlu0 %708
      %710 = vrot.lane.b32.xlu0 %v637, 64
      %v711 = vpop.permute.xlu0 %710
      %712 = vrot.lane.b32.xlu0 %v628, 64
      %v713 = vpop.permute.xlu0 %712
      %714 = vrot.lane.b32.xlu0 %v638, 64
      %v715 = vpop.permute.xlu0 %714
      %716 = vrot.lane.b32.xlu0 %v639, 64
      %v717 = vpop.permute.xlu0 %716
      %718 = vrot.lane.b32.xlu0 %v634, 64
      %v719 = vpop.permute.xlu0 %718
      %v720 = vsel %vm493, %v649, %v651
      %v721 = vsel %vm493, %v651, %v653
      %v722 = vsel %vm493, %v655, %v657
      %v723 = vsel %vm493, %v657, %v659
      %v724 = vsel %vm493, %v661, %v663
      %v725 = vsel %vm493, %v663, %v665
      %v726 = vsel %vm493, %v667, %v669
      %v727 = vsel %vm493, %v669, %v671
      %v728 = vsel %vm493, %v673, %v675
      %v729 = vsel %vm493, %v675, %v677
      %v730 = vsel %vm493, %v679, %v681
      %v731 = vsel %vm493, %v681, %v683
      %v732 = vsel %vm493, %v685, %v687
      %v733 = vsel %vm493, %v687, %v689
      %v734 = vsel %vm493, %v691, %v693
      %v735 = vsel %vm493, %v693, %v695
      %v736 = vsel %vm493, %v697, %v699
      %v737 = vsel %vm493, %v699, %v701
      %v738 = vsel %vm493, %v703, %v705
      %v739 = vsel %vm493, %v705, %v707
      %v740 = vsel %vm493, %v709, %v711
      %v741 = vsel %vm493, %v711, %v713
      %v742 = vsel %vm493, %v715, %v717
      %v743 = vsel %vm493, %v717, %v719
      %vm768 = vcmask 785408
      %v770 = vsel %vm768, %v640, 0
      %v773 = vsel %vm768, %v641, 0
      %v776 = vsel %vm768, %v642, 0
      %v779 = vsel %vm768, %v643, 0
      %v782 = vsel %vm768, %v644, 0
      %v785 = vsel %vm768, %v645, 0
      %v788 = vsel %vm768, %v646, 0
      %v791 = vsel %vm768, %v647, 0
      %793 = vmatprep.subr.mxu0 %v721
      %794 = vmatpush1.msra.mxu0 %v720
      %795 = vmatprep.subr.mxu0 %v723
      %796 = vmatpush1.msra.mxu0 %v722
      %797 = vmatprep.subr.mxu0 %v725
      %798 = vmatpush1.msra.mxu0 %v724
      %799 = vmatprep.subr.mxu0 %v727
      %800 = vmatpush1.msra.mxu0 %v726
      %801 = vmatprep.subr.mxu0 %v729
      %802 = vmatpush1.msra.mxu0 %v728
      %803 = vmatprep.subr.mxu0 %v731
      %804 = vmatpush1.msra.mxu0 %v730
      %805 = vmatprep.subr.mxu0 %v733
      %806 = vmatpush1.msra.mxu0 %v732
      %807 = vmatprep.subr.mxu0 %v735
      %808 = vmatpush1.msra.mxu0 %v734
      %809 = vmatprep.subr.mxu0 %v737
      %810 = vmatpush1.msra.mxu0 %v736
      %811 = vmatprep.subr.mxu0 %v739
      %812 = vmatpush1.msra.mxu0 %v738
      %813 = vmatprep.subr.mxu0 %v741
      %814 = vmatpush1.msra.mxu0 %v740
      %815 = vmatprep.subr.mxu0 %v743
      %816 = vmatpush1.msra.mxu0 %v742
      %817 = vmatprep.subr.mxu0 0.0
      %818 = vmatpush1.msra.mxu0 0.0
      %819 = vmatprep.subr.mxu0 0.0
      %820 = vmatpush1.msra.mxu0 0.0
      %821 = vmatprep.subr.mxu0 0.0
      %822 = vmatpush1.msra.mxu0 0.0
      %823 = vmatprep.subr.mxu0 0.0
      %824 = vmatpush1.msra.mxu0 0.0
      %825 = vmatprep.subr.mxu0 0.0
      %826 = vmatpush1.msra.mxu0 0.0
      %827 = vmatprep.subr.mxu0 0.0
      %828 = vmatpush1.msra.mxu0 0.0
      %829 = vmatprep.subr.mxu0 0.0
      %830 = vmatpush1.msra.mxu0 0.0
      %831 = vmatprep.subr.mxu0 0.0
      %832 = vmatpush1.msra.mxu0 0.0
      %833 = vmatprep.subr.mxu0 0.0
      %834 = vmatpush1.msra.mxu0 0.0
      %835 = vmatprep.subr.mxu0 0.0
      %836 = vmatpush1.msra.mxu0 0.0
      %837 = vmatprep.subr.mxu0 0.0
      %838 = vmatpush1.msra.mxu0 0.0
      %839 = vmatprep.subr.mxu0 0.0
      %840 = vmatpush1.msra.mxu0 0.0
      %841 = vmatprep.subr.mxu0 0.0
      %842 = vmatpush1.msra.mxu0 0.0
      %843 = vmatprep.subr.mxu0 0.0
      %844 = vmatpush1.msra.mxu0 0.0
      %845 = vmatprep.subr.mxu0 0.0
      %846 = vmatpush1.msra.mxu0 0.0
      %847 = vmatprep.subr.mxu0 0.0
      %848 = vmatpush1.msra.mxu0 0.0
      %849 = vmatprep.subr.mxu0 0.0
      %850 = vmatpush1.msra.mxu0 0.0
      %851 = vmatprep.subr.mxu0 0.0
      %852 = vmatpush1.msra.mxu0 0.0
      %853 = vmatprep.subr.mxu0 0.0
      %854 = vmatpush1.msra.mxu0 0.0
      %855 = vmatprep.subr.mxu0 0.0
      %856 = vmatpush1.msra.mxu0 0.0
      %857 = vmatprep.mubr.f32.mxu0 0.0
      %858 = vmatmul.mubr.f32.gmra.mrb[0].mxu0 %v770
      %v859 = vpop.f32.mrb[0].mxu0
      %v860 = vadd.f32 0.0, %v859
      %v861 = vpop.f32.mrb[0].mxu0
      %v862 = vadd.f32 0.0, %v861
      %863 = vmatprep.mubr.f32.mxu0 0.0
      %864 = vmatmul.mubr.f32.gmra.mrb[0].mxu0 %v773
      %v865 = vpop.f32.mrb[0].mxu0
      %v866 = vadd.f32 0.0, %v865
      %v867 = vpop.f32.mrb[0].mxu0
      %v868 = vadd.f32 0.0, %v867
      %869 = vmatprep.mubr.f32.mxu0 0.0
      %870 = vmatmul.mubr.f32.gmra.mrb[0].mxu0 %v776
      %v871 = vpop.f32.mrb[0].mxu0
      %v872 = vadd.f32 0.0, %v871
      %v873 = vpop.f32.mrb[0].mxu0
      %v874 = vadd.f32 0.0, %v873
      %875 = vmatprep.mubr.f32.mxu0 0.0
      %876 = vmatmul.mubr.f32.gmra.mrb[0].mxu0 %v779
      %v877 = vpop.f32.mrb[0].mxu0
      %v878 = vadd.f32 0.0, %v877
      %v879 = vpop.f32.mrb[0].mxu0
      %v880 = vadd.f32 0.0, %v879
      %881 = vmatprep.mubr.f32.mxu0 0.0
      %882 = vmatmul.mubr.f32.gmra.mrb[0].mxu0 %v782
      %v883 = vpop.f32.mrb[0].mxu0
      %v884 = vadd.f32 0.0, %v883
      %v885 = vpop.f32.mrb[0].mxu0
      %v886 = vadd.f32 0.0, %v885
      %887 = vmatprep.mubr.f32.mxu0 0.0
      %888 = vmatmul.mubr.f32.gmra.mrb[0].mxu0 %v785
      %v889 = vpop.f32.mrb[0].mxu0
      %v890 = vadd.f32 0.0, %v889
      %v891 = vpop.f32.mrb[0].mxu0
      %v892 = vadd.f32 0.0, %v891
      %893 = vmatprep.mubr.f32.mxu0 0.0
      %894 = vmatmul.mubr.f32.gmra.mrb[0].mxu0 %v788
      %v895 = vpop.f32.mrb[0].mxu0
      %v896 = vadd.f32 0.0, %v895
      %v897 = vpop.f32.mrb[0].mxu0
      %v898 = vadd.f32 0.0, %v897
      %899 = vmatprep.mubr.f32.mxu0 0.0
      %900 = vmatmul.mubr.f32.gmra.mrb[0].mxu0 %v791
      %v901 = vpop.f32.mrb[0].mxu0
      %v902 = vadd.f32 0.0, %v901
      %v903 = vpop.f32.mrb[0].mxu0
      %v904 = vadd.f32 0.0, %v903
      %905 = vdwg.mxu0
      %v906 = vmax.f32 %v860, %v872
      %v907 = vmax.f32 %v862, %v874
      %v908 = vmax.f32 %v866, %v878
      %v909 = vmax.f32 %v868, %v880
      %v910 = vmax.f32 %v884, %v896
      %v911 = vmax.f32 %v886, %v898
      %v912 = vmax.f32 %v890, %v902
      %v913 = vmax.f32 %v892, %v904
      %v914 = vmax.f32 %v906, %v910
      %v915 = vmax.f32 %v907, %v911
      %v916 = vmax.f32 %v908, %v912
      %v917 = vmax.f32 %v909, %v913
      %v918 = vld [vmem:[%s5] sm:$0xff]
      %v919 = vld [vmem:[%s5 + $0x8] sm:$0xff]
      %921 = vset.pattern.permute.xlu0 0
      %922 = vperm.xlu0 %921, %v918
      %v923 = vpop.permute.xlu0 %922
      %926 = vset.pattern.permute.xlu0 0
      %927 = vperm.xlu0 %926, %v919
      %v928 = vpop.permute.xlu0 %927
      %v930 = vadd.f32 %v914, %v923
      %v931 = vadd.f32 %v915, %v923
      %v932 = vadd.f32 %v916, %v928
      %v933 = vadd.f32 %v917, %v928
      %v934 = vmax.f32 %v930, 0.0
      %v935 = vmax.f32 %v931, 0.0
      %v936 = vmax.f32 %v932, 0.0
      %v937 = vmax.f32 %v933, 0.0
      %v938 = vld [vmem:[%s1] sm:$0x3]
      %v940 = vlaneseq
      %v941 = vshrl.u32 %v940, 7
      %v942 = vsub.s32 0, %v941
      %v943 = vrot.slane %v938, %v942
      %v944 = vlaneseq
      %v945 = vshrl.u32 %v944, 7
      %v946 = vsub.s32 1, %v945
      %v947 = vrot.slane %v938, %v946
      %v950 = vmul.f32 %v934, %v943
      %v951 = vmul.f32 %v935, %v947
      %v952 = vmul.f32 %v936, %v943
      %v953 = vmul.f32 %v937, %v947
      %958 = vrot.lane.b32.xlu0 %v950, 64
      %v959 = vpop.permute.xlu0 %958
      %960 = vrot.lane.b32.xlu0 %v951, 64
      %v961 = vpop.permute.xlu0 %960
      %962 = vrot.lane.b32.xlu0 %v952, 64
      %v963 = vpop.permute.xlu0 %962
      %964 = vrot.lane.b32.xlu0 %v953, 64
      %v965 = vpop.permute.xlu0 %964
      %v966 = vsel %vm493, %v959, %v961
      %v967 = vsel %vm493, %v963, %v965
      %974 = vst.msk [vmem:[#allocation2] sm:$0xff] %vm535, %v959
      %975 = vst [vmem:[#allocation2 + $0x8] sm:$0xff] %v966
      %976 = vst.msk [vmem:[#allocation2 + $0x10] sm:$0xff] %vm538, %v961
      %977 = vst.msk [vmem:[#allocation2 + $0x18] sm:$0xff] %vm535, %v963
      %978 = vst [vmem:[#allocation2 + $0x20] sm:$0xff] %v967
      %979 = vst.msk [vmem:[#allocation2 + $0x28] sm:$0xff] %vm538, %v965
      %v980 = vld [vmem:[#allocation2] sm:$0xff]
      %v981 = vld [vmem:[#allocation2 + $0x8] sm:$0xff]
      %v982 = vld [vmem:[#allocation2 + $0x10] sm:$0xff]
      %v983 = vld [vmem:[#allocation2 + $0x18] sm:$0xff]
      %v984 = vld [vmem:[#allocation2 + $0x20] sm:$0xff]
      %v985 = vld [vmem:[#allocation2 + $0x28] sm:$0xff]
      %986 = vrot.lane.b32.xlu0 %v950, 63
      %v987 = vpop.permute.xlu0 %986
      %988 = vrot.lane.b32.xlu0 %v951, 63
      %v989 = vpop.permute.xlu0 %988
      %990 = vrot.lane.b32.xlu0 %v952, 63
      %v991 = vpop.permute.xlu0 %990
      %992 = vrot.lane.b32.xlu0 %v953, 63
      %v993 = vpop.permute.xlu0 %992
      %vm994 = vcmask 515072
      %v995 = vsel %vm994, %v987, %v989
      %v996 = vsel %vm994, %v991, %v993
      %1003 = vrot.lane.b32.xlu0 %v980, 126
      %v1004 = vpop.permute.xlu0 %1003
      %1005 = vrot.lane.b32.xlu0 %v981, 126
      %v1006 = vpop.permute.xlu0 %1005
      %1007 = vrot.lane.b32.xlu0 %v982, 126
      %v1008 = vpop.permute.xlu0 %1007
      %1009 = vrot.lane.b32.xlu0 %v983, 126
      %v1010 = vpop.permute.xlu0 %1009
      %1011 = vrot.lane.b32.xlu0 %v984, 126
      %v1012 = vpop.permute.xlu0 %1011
      %1013 = vrot.lane.b32.xlu0 %v985, 126
      %v1014 = vpop.permute.xlu0 %1013
      %v1015 = vsel %vm584, %v1004, %v1006
      %v1016 = vsel %vm584, %v1006, %v1008
      %v1017 = vsel %vm584, %v1010, %v1012
      %v1018 = vsel %vm584, %v1012, %v1014
      %v1019 = vld [vmem:[%s6] sm:$0xff]
      %v1020 = vld [vmem:[%s6 + $0x8] sm:$0xff]
      %1021 = vrot.lane.b32.xlu0 %v980, 65
      %v1022 = vpop.permute.xlu0 %1021
      %1023 = vrot.lane.b32.xlu0 %v981, 65
      %v1024 = vpop.permute.xlu0 %1023
      %1025 = vrot.lane.b32.xlu0 %v982, 65
      %v1026 = vpop.permute.xlu0 %1025
      %1027 = vrot.lane.b32.xlu0 %v983, 65
      %v1028 = vpop.permute.xlu0 %1027
      %1029 = vrot.lane.b32.xlu0 %v984, 65
      %v1030 = vpop.permute.xlu0 %1029
      %1031 = vrot.lane.b32.xlu0 %v985, 65
      %v1032 = vpop.permute.xlu0 %1031
      %1033 = vrot.lane.b32.xlu0 %v987, 65
      %v1034 = vpop.permute.xlu0 %1033
      %1035 = vrot.lane.b32.xlu0 %v995, 65
      %v1036 = vpop.permute.xlu0 %1035
      %1037 = vrot.lane.b32.xlu0 %v989, 65
      %v1038 = vpop.permute.xlu0 %1037
      %1039 = vrot.lane.b32.xlu0 %v991, 65
      %v1040 = vpop.permute.xlu0 %1039
      %1041 = vrot.lane.b32.xlu0 %v996, 65
      %v1042 = vpop.permute.xlu0 %1041
      %1043 = vrot.lane.b32.xlu0 %v993, 65
      %v1044 = vpop.permute.xlu0 %1043
      %1045 = vrot.lane.b32.xlu0 %v1015, 65
      %v1046 = vpop.permute.xlu0 %1045
      %1047 = vrot.lane.b32.xlu0 %v1016, 65
      %v1048 = vpop.permute.xlu0 %1047
      %1049 = vrot.lane.b32.xlu0 %v1008, 65
      %v1050 = vpop.permute.xlu0 %1049
      %1051 = vrot.lane.b32.xlu0 %v1017, 65
      %v1052 = vpop.permute.xlu0 %1051
      %1053 = vrot.lane.b32.xlu0 %v1018, 65
      %v1054 = vpop.permute.xlu0 %1053
      %1055 = vrot.lane.b32.xlu0 %v1014, 65
      %v1056 = vpop.permute.xlu0 %1055
      %vm1057 = vcmask 531456
      %v1058 = vsel %vm1057, %v1022, %v1024
      %v1059 = vsel %vm1057, %v1024, %v1026
      %v1060 = vsel %vm1057, %v1028, %v1030
      %v1061 = vsel %vm1057, %v1030, %v1032
      %v1062 = vsel %vm1057, %v1034, %v1036
      %v1063 = vsel %vm1057, %v1036, %v1038
      %v1064 = vsel %vm1057, %v1040, %v1042
      %v1065 = vsel %vm1057, %v1042, %v1044
      %v1066 = vsel %vm1057, %v1046, %v1048
      %v1067 = vsel %vm1057, %v1048, %v1050
      %v1068 = vsel %vm1057, %v1052, %v1054
      %v1069 = vsel %vm1057, %v1054, %v1056
      %vm1082 = vcmask 392192
      %v1084 = vsel %vm1082, %v1019, 0
      %v1087 = vsel %vm1082, %v1020, 0
      %1089 = vmatprep.subr.mxu0 %v1059
      %1090 = vmatpush1.msra.mxu0 %v1058
      %1091 = vmatprep.subr.mxu0 %v1061
      %1092 = vmatpush1.msra.mxu0 %v1060
      %1093 = vmatprep.subr.mxu0 %v1063
      %1094 = vmatpush1.msra.mxu0 %v1062
      %1095 = vmatprep.subr.mxu0 %v1065
      %1096 = vmatpush1.msra.mxu0 %v1064
      %1097 = vmatprep.subr.mxu0 %v1067
      %1098 = vmatpush1.msra.mxu0 %v1066
      %1099 = vmatprep.subr.mxu0 %v1069
      %1100 = vmatpush1.msra.mxu0 %v1068
      %1101 = vmatprep.subr.mxu0 0.0
      %1102 = vmatpush1.msra.mxu0 0.0
      %1103 = vmatprep.subr.mxu0 0.0
      %1104 = vmatpush1.msra.mxu0 0.0
      %1105 = vmatprep.subr.mxu0 0.0
      %1106 = vmatpush1.msra.mxu0 0.0
      %1107 = vmatprep.subr.mxu0 0.0
      %1108 = vmatpush1.msra.mxu0 0.0
      %1109 = vmatprep.subr.mxu0 0.0
      %1110 = vmatpush1.msra.mxu0 0.0
      %1111 = vmatprep.subr.mxu0 0.0
      %1112 = vmatpush1.msra.mxu0 0.0
      %1113 = vmatprep.subr.mxu0 0.0
      %1114 = vmatpush1.msra.mxu0 0.0
      %1115 = vmatprep.subr.mxu0 0.0
      %1116 = vmatpush1.msra.mxu0 0.0
      %1117 = vmatprep.subr.mxu0 0.0
      %1118 = vmatpush1.msra.mxu0 0.0
      %1119 = vmatprep.subr.mxu0 0.0
      %1120 = vmatpush1.msra.mxu0 0.0
      %1121 = vmatprep.subr.mxu0 0.0
      %1122 = vmatpush1.msra.mxu0 0.0
      %1123 = vmatprep.subr.mxu0 0.0
      %1124 = vmatpush1.msra.mxu0 0.0
      %1125 = vmatprep.subr.mxu0 0.0
      %1126 = vmatpush1.msra.mxu0 0.0
      %1127 = vmatprep.subr.mxu0 0.0
      %1128 = vmatpush1.msra.mxu0 0.0
      %1129 = vmatprep.subr.mxu0 0.0
      %1130 = vmatpush1.msra.mxu0 0.0
      %1131 = vmatprep.subr.mxu0 0.0
      %1132 = vmatpush1.msra.mxu0 0.0
      %1133 = vmatprep.subr.mxu0 0.0
      %1134 = vmatpush1.msra.mxu0 0.0
      %1135 = vmatprep.subr.mxu0 0.0
      %1136 = vmatpush1.msra.mxu0 0.0
      %1137 = vmatprep.subr.mxu0 0.0
      %1138 = vmatpush1.msra.mxu0 0.0
      %1139 = vmatprep.subr.mxu0 0.0
      %1140 = vmatpush1.msra.mxu0 0.0
      %1141 = vmatprep.subr.mxu0 0.0
      %1142 = vmatpush1.msra.mxu0 0.0
      %1143 = vmatprep.subr.mxu0 0.0
      %1144 = vmatpush1.msra.mxu0 0.0
      %1145 = vmatprep.subr.mxu0 0.0
      %1146 = vmatpush1.msra.mxu0 0.0
      %1147 = vmatprep.subr.mxu0 0.0
      %1148 = vmatpush1.msra.mxu0 0.0
      %1149 = vmatprep.subr.mxu0 0.0
      %1150 = vmatpush1.msra.mxu0 0.0
      %1151 = vmatprep.subr.mxu0 0.0
      %1152 = vmatpush1.msra.mxu0 0.0
      %1153 = vmatprep.mubr.f32.mxu0 0.0
      %1154 = vmatmul.mubr.f32.gmra.mrb[0].mxu0 %v1084
      %v1155 = vpop.f32.mrb[0].mxu0
      %v1156 = vadd.f32 0.0, %v1155
      %v1157 = vpop.f32.mrb[0].mxu0
      %v1158 = vadd.f32 0.0, %v1157
      %1159 = vmatprep.mubr.f32.mxu0 0.0
      %1160 = vmatmul.mubr.f32.gmra.mrb[0].mxu0 %v1087
      %v1161 = vpop.f32.mrb[0].mxu0
      %v1162 = vadd.f32 0.0, %v1161
      %v1163 = vpop.f32.mrb[0].mxu0
      %v1164 = vadd.f32 0.0, %v1163
      %1165 = vdwg.mxu0
      %1170 = vrot.lane.b32.xlu0 %v1156, 64
      %v1171 = vpop.permute.xlu0 %1170
      %1172 = vrot.lane.b32.xlu0 %v1158, 64
      %v1173 = vpop.permute.xlu0 %1172
      %1174 = vrot.lane.b32.xlu0 %v1162, 64
      %v1175 = vpop.permute.xlu0 %1174
      %1176 = vrot.lane.b32.xlu0 %v1164, 64
      %v1177 = vpop.permute.xlu0 %1176
      %v1178 = vsel %vm493, %v1171, %v1173
      %v1179 = vsel %vm493, %v1175, %v1177
      %1186 = vst.msk [vmem:[#allocation2] sm:$0xff] %vm535, %v1171
      %1187 = vst [vmem:[#allocation2 + $0x8] sm:$0xff] %v1178
      %1188 = vst.msk [vmem:[#allocation2 + $0x10] sm:$0xff] %vm538, %v1173
      %1189 = vst.msk [vmem:[#allocation2 + $0x18] sm:$0xff] %vm535, %v1175
      %1190 = vst [vmem:[#allocation2 + $0x20] sm:$0xff] %v1179
      %1191 = vst.msk [vmem:[#allocation2 + $0x28] sm:$0xff] %vm538, %v1177
      %v1192 = vld [vmem:[#allocation2] sm:$0xff]
      %v1193 = vld [vmem:[#allocation2 + $0x8] sm:$0xff]
      %v1194 = vld [vmem:[#allocation2 + $0x10] sm:$0xff]
      %v1195 = vld [vmem:[#allocation2 + $0x18] sm:$0xff]
      %v1196 = vld [vmem:[#allocation2 + $0x20] sm:$0xff]
      %v1197 = vld [vmem:[#allocation2 + $0x28] sm:$0xff]
      %1204 = vrot.lane.b32.xlu0 %v1192, 63
      %v1205 = vpop.permute.xlu0 %1204
      %1206 = vrot.lane.b32.xlu0 %v1193, 63
      %v1207 = vpop.permute.xlu0 %1206
      %1208 = vrot.lane.b32.xlu0 %v1194, 63
      %v1209 = vpop.permute.xlu0 %1208
      %1210 = vrot.lane.b32.xlu0 %v1195, 63
      %v1211 = vpop.permute.xlu0 %1210
      %1212 = vrot.lane.b32.xlu0 %v1196, 63
      %v1213 = vpop.permute.xlu0 %1212
      %1214 = vrot.lane.b32.xlu0 %v1197, 63
      %v1215 = vpop.permute.xlu0 %1214
      %v1216 = vsel %vm994, %v1205, %v1207
      %v1217 = vsel %vm994, %v1207, %v1209
      %v1218 = vsel %vm994, %v1211, %v1213
      %v1219 = vsel %vm994, %v1213, %v1215
      %v1224 = vmax.f32 %v1156, %v1216
      %v1225 = vmax.f32 %v1158, %v1217
      %v1226 = vmax.f32 %v1162, %v1218
      %v1227 = vmax.f32 %v1164, %v1219
      %1228 = vrot.lane.b32.xlu0 %v1192, 127
      %v1229 = vpop.permute.xlu0 %1228
      %1230 = vrot.lane.b32.xlu0 %v1193, 127
      %v1231 = vpop.permute.xlu0 %1230
      %1232 = vrot.lane.b32.xlu0 %v1194, 127
      %v1233 = vpop.permute.xlu0 %1232
      %1234 = vrot.lane.b32.xlu0 %v1195, 127
      %v1235 = vpop.permute.xlu0 %1234
      %1236 = vrot.lane.b32.xlu0 %v1196, 127
      %v1237 = vpop.permute.xlu0 %1236
      %1238 = vrot.lane.b32.xlu0 %v1197, 127
      %v1239 = vpop.permute.xlu0 %1238
      %v1240 = vsel %vm567, %v1229, %v1231
      %v1241 = vsel %vm567, %v1231, %v1233
      %v1242 = vsel %vm567, %v1235, %v1237
      %v1243 = vsel %vm567, %v1237, %v1239
      %v1250 = vmax.f32 %v1192, %v1240
      %v1251 = vmax.f32 %v1193, %v1241
      %v1252 = vmax.f32 %v1194, %v1233
      %v1253 = vmax.f32 %v1195, %v1242
      %v1254 = vmax.f32 %v1196, %v1243
      %v1255 = vmax.f32 %v1197, %v1239
      %1262 = vrot.lane.b32.xlu0 %v1250, 62
      %v1263 = vpop.permute.xlu0 %1262
      %1264 = vrot.lane.b32.xlu0 %v1251, 62
      %v1265 = vpop.permute.xlu0 %1264
      %1266 = vrot.lane.b32.xlu0 %v1252, 62
      %v1267 = vpop.permute.xlu0 %1266
      %1268 = vrot.lane.b32.xlu0 %v1253, 62
      %v1269 = vpop.permute.xlu0 %1268
      %1270 = vrot.lane.b32.xlu0 %v1254, 62
      %v1271 = vpop.permute.xlu0 %1270
      %1272 = vrot.lane.b32.xlu0 %v1255, 62
      %v1273 = vpop.permute.xlu0 %1272
      %vm1274 = vcmask 506880
      %v1275 = vsel %vm1274, %v1263, %v1265
      %v1276 = vsel %vm1274, %v1265, %v1267
      %v1277 = vsel %vm1274, %v1269, %v1271
      %v1278 = vsel %vm1274, %v1271, %v1273
      %v1283 = vmax.f32 %v1224, %v1275
      %v1284 = vmax.f32 %v1225, %v1276
      %v1285 = vmax.f32 %v1226, %v1277
      %v1286 = vmax.f32 %v1227, %v1278
      %v1287 = vld [vmem:[%s7] sm:$0xff]
      %v1288 = vld [vmem:[%s7 + $0x8] sm:$0xff]
      %1290 = vset.pattern.permute.xlu0 0
      %1291 = vperm.xlu0 %1290, %v1287
      %v1292 = vpop.permute.xlu0 %1291
      %1295 = vset.pattern.permute.xlu0 0
      %1296 = vperm.xlu0 %1295, %v1288
      %v1297 = vpop.permute.xlu0 %1296
      %v1299 = vadd.f32 %v1283, %v1292
      %v1300 = vadd.f32 %v1284, %v1292
      %v1301 = vadd.f32 %v1285, %v1297
      %v1302 = vadd.f32 %v1286, %v1297
      %v1303 = vmax.f32 %v1299, 0.0
      %v1304 = vmax.f32 %v1300, 0.0
      %v1305 = vmax.f32 %v1301, 0.0
      %v1306 = vmax.f32 %v1302, 0.0
      %v1307 = vld [vmem:[%s2] sm:$0x3]
      %v1309 = vlaneseq
      %v1310 = vshrl.u32 %v1309, 7
      %v1311 = vsub.s32 0, %v1310
      %v1312 = vrot.slane %v1307, %v1311
      %v1313 = vlaneseq
      %v1314 = vshrl.u32 %v1313, 7
      %v1315 = vsub.s32 1, %v1314
      %v1316 = vrot.slane %v1307, %v1315
      %v1319 = vmul.f32 %v1303, %v1312
      %v1320 = vmul.f32 %v1304, %v1316
      %v1321 = vmul.f32 %v1305, %v1312
      %v1322 = vmul.f32 %v1306, %v1316
      %1327 = vrot.lane.b32.xlu0 %v1319, 64
      %v1328 = vpop.permute.xlu0 %1327
      %1329 = vrot.lane.b32.xlu0 %v1320, 64
      %v1330 = vpop.permute.xlu0 %1329
      %1331 = vrot.lane.b32.xlu0 %v1321, 64
      %v1332 = vpop.permute.xlu0 %1331
      %1333 = vrot.lane.b32.xlu0 %v1322, 64
      %v1334 = vpop.permute.xlu0 %1333
      %v1335 = vsel %vm493, %v1328, %v1330
      %v1336 = vsel %vm493, %v1332, %v1334
      %1343 = vst.msk [vmem:[#allocation2] sm:$0xff] %vm535, %v1328
      %1344 = vst [vmem:[#allocation2 + $0x8] sm:$0xff] %v1335
      %1345 = vst.msk [vmem:[#allocation2 + $0x10] sm:$0xff] %vm538, %v1330
      %1346 = vst.msk [vmem:[#allocation2 + $0x18] sm:$0xff] %vm535, %v1332
      %1347 = vst [vmem:[#allocation2 + $0x20] sm:$0xff] %v1336
      %1348 = vst.msk [vmem:[#allocation2 + $0x28] sm:$0xff] %vm538, %v1334
      %v1349 = vld [vmem:[#allocation2] sm:$0xff]
      %v1350 = vld [vmem:[#allocation2 + $0x8] sm:$0xff]
      %v1351 = vld [vmem:[#allocation2 + $0x10] sm:$0xff]
      %v1352 = vld [vmem:[#allocation2 + $0x18] sm:$0xff]
      %v1353 = vld [vmem:[#allocation2 + $0x20] sm:$0xff]
      %v1354 = vld [vmem:[#allocation2 + $0x28] sm:$0xff]
      %1355 = vrot.lane.b32.xlu0 %v1319, 60
      %v1356 = vpop.permute.xlu0 %1355
      %1357 = vrot.lane.b32.xlu0 %v1320, 60
      %v1358 = vpop.permute.xlu0 %1357
      %1359 = vrot.lane.b32.xlu0 %v1321, 60
      %v1360 = vpop.permute.xlu0 %1359
      %1361 = vrot.lane.b32.xlu0 %v1322, 60
      %v1362 = vpop.permute.xlu0 %1361
      %vm1363 = vcmask 490496
      %v1364 = vsel %vm1363, %v1356, %v1358
      %v1365 = vsel %vm1363, %v1360, %v1362
      %1372 = vrot.lane.b32.xlu0 %v1349, 120
      %v1373 = vpop.permute.xlu0 %1372
      %1374 = vrot.lane.b32.xlu0 %v1350, 120
      %v1375 = vpop.permute.xlu0 %1374
      %1376 = vrot.lane.b32.xlu0 %v1351, 120
      %v1377 = vpop.permute.xlu0 %1376
      %1378 = vrot.lane.b32.xlu0 %v1352, 120
      %v1379 = vpop.permute.xlu0 %1378
      %1380 = vrot.lane.b32.xlu0 %v1353, 120
      %v1381 = vpop.permute.xlu0 %1380
      %1382 = vrot.lane.b32.xlu0 %v1354, 120
      %v1383 = vpop.permute.xlu0 %1382
      %vm1384 = vcmask 982016
      %v1385 = vsel %vm1384, %v1373, %v1375
      %v1386 = vsel %vm1384, %v1375, %v1377
      %v1387 = vsel %vm1384, %v1379, %v1381
      %v1388 = vsel %vm1384, %v1381, %v1383
      %v1389 = vld [vmem:[%s8] sm:$0xff]
      %v1390 = vld [vmem:[%s8 + $0x8] sm:$0xff]
      %v1391 = vld [vmem:[%s8 + $0x10] sm:$0xff]
      %v1392 = vld [vmem:[%s8 + $0x18] sm:$0xff]
      %1393 = vrot.lane.b32.xlu0 %v1349, 68
      %v1394 = vpop.permute.xlu0 %1393
      %1395 = vrot.lane.b32.xlu0 %v1350, 68
      %v1396 = vpop.permute.xlu0 %1395
      %1397 = vrot.lane.b32.xlu0 %v1351, 68
      %v1398 = vpop.permute.xlu0 %1397
      %1399 = vrot.lane.b32.xlu0 %v1352, 68
      %v1400 = vpop.permute.xlu0 %1399
      %1401 = vrot.lane.b32.xlu0 %v1353, 68
      %v1402 = vpop.permute.xlu0 %1401
      %1403 = vrot.lane.b32.xlu0 %v1354, 68
      %v1404 = vpop.permute.xlu0 %1403
      %1405 = vrot.lane.b32.xlu0 %v1356, 68
      %v1406 = vpop.permute.xlu0 %1405
      %1407 = vrot.lane.b32.xlu0 %v1364, 68
      %v1408 = vpop.permute.xlu0 %1407
      %1409 = vrot.lane.b32.xlu0 %v1358, 68
      %v1410 = vpop.permute.xlu0 %1409
      %1411 = vrot.lane.b32.xlu0 %v1360, 68
      %v1412 = vpop.permute.xlu0 %1411
      %1413 = vrot.lane.b32.xlu0 %v1365, 68
      %v1414 = vpop.permute.xlu0 %1413
      %1415 = vrot.lane.b32.xlu0 %v1362, 68
      %v1416 = vpop.permute.xlu0 %1415
      %1417 = vrot.lane.b32.xlu0 %v1385, 68
      %v1418 = vpop.permute.xlu0 %1417
      %1419 = vrot.lane.b32.xlu0 %v1386, 68
      %v1420 = vpop.permute.xlu0 %1419
      %1421 = vrot.lane.b32.xlu0 %v1377, 68
      %v1422 = vpop.permute.xlu0 %1421
      %1423 = vrot.lane.b32.xlu0 %v1387, 68
      %v1424 = vpop.permute.xlu0 %1423
      %1425 = vrot.lane.b32.xlu0 %v1388, 68
      %v1426 = vpop.permute.xlu0 %1425
      %1427 = vrot.lane.b32.xlu0 %v1383, 68
      %v1428 = vpop.permute.xlu0 %1427
      %vm1429 = vcmask 556032
      %v1430 = vsel %vm1429, %v1394, %v1396
      %v1431 = vsel %vm1429, %v1396, %v1398
      %v1432 = vsel %vm1429, %v1400, %v1402
      %v1433 = vsel %vm1429, %v1402, %v1404
      %v1434 = vsel %vm1429, %v1406, %v1408
      %v1435 = vsel %vm1429, %v1408, %v1410
      %v1436 = vsel %vm1429, %v1412, %v1414
      %v1437 = vsel %vm1429, %v1414, %v1416
      %v1438 = vsel %vm1429, %v1418, %v1420
      %v1439 = vsel %vm1429, %v1420, %v1422
      %v1440 = vsel %vm1429, %v1424, %v1426
      %v1441 = vsel %vm1429, %v1426, %v1428
      %v1455 = vsel %vm1082, %v1389, 0
      %v1458 = vsel %vm1082, %v1390, 0
      %v1461 = vsel %vm1082, %v1391, 0
      %v1464 = vsel %vm1082, %v1392, 0
      %1466 = vmatprep.subr.mxu0 %v1431
      %1467 = vmatpush1.msra.mxu0 %v1430
      %1468 = vmatprep.subr.mxu0 %v1433
      %1469 = vmatpush1.msra.mxu0 %v1432
      %1470 = vmatprep.subr.mxu0 %v1435
      %1471 = vmatpush1.msra.mxu0 %v1434
      %1472 = vmatprep.subr.mxu0 %v1437
      %1473 = vmatpush1.msra.mxu0 %v1436
      %1474 = vmatprep.subr.mxu0 %v1439
      %1475 = vmatpush1.msra.mxu0 %v1438
      %1476 = vmatprep.subr.mxu0 %v1441
      %1477 = vmatpush1.msra.mxu0 %v1440
      %1478 = vmatprep.subr.mxu0 0.0
      %1479 = vmatpush1.msra.mxu0 0.0
      %1480 = vmatprep.subr.mxu0 0.0
      %1481 = vmatpush1.msra.mxu0 0.0
      %1482 = vmatprep.subr.mxu0 0.0
      %1483 = vmatpush1.msra.mxu0 0.0
      %1484 = vmatprep.subr.mxu0 0.0
      %1485 = vmatpush1.msra.mxu0 0.0
      %1486 = vmatprep.subr.mxu0 0.0
      %1487 = vmatpush1.msra.mxu0 0.0
      %1488 = vmatprep.subr.mxu0 0.0
      %1489 = vmatpush1.msra.mxu0 0.0
      %1490 = vmatprep.subr.mxu0 0.0
      %1491 = vmatpush1.msra.mxu0 0.0
      %1492 = vmatprep.subr.mxu0 0.0
      %1493 = vmatpush1.msra.mxu0 0.0
      %1494 = vmatprep.subr.mxu0 0.0
      %1495 = vmatpush1.msra.mxu0 0.0
      %1496 = vmatprep.subr.mxu0 0.0
      %1497 = vmatpush1.msra.mxu0 0.0
      %1498 = vmatprep.subr.mxu0 0.0
      %1499 = vmatpush1.msra.mxu0 0.0
      %1500 = vmatprep.subr.mxu0 0.0
      %1501 = vmatpush1.msra.mxu0 0.0
      %1502 = vmatprep.subr.mxu0 0.0
      %1503 = vmatpush1.msra.mxu0 0.0
      %1504 = vmatprep.subr.mxu0 0.0
      %1505 = vmatpush1.msra.mxu0 0.0
      %1506 = vmatprep.subr.mxu0 0.0
      %1507 = vmatpush1.msra.mxu0 0.0
      %1508 = vmatprep.subr.mxu0 0.0
      %1509 = vmatpush1.msra.mxu0 0.0
      %1510 = vmatprep.subr.mxu0 0.0
      %1511 = vmatpush1.msra.mxu0 0.0
      %1512 = vmatprep.subr.mxu0 0.0
      %1513 = vmatpush1.msra.mxu0 0.0
      %1514 = vmatprep.subr.mxu0 0.0
      %1515 = vmatpush1.msra.mxu0 0.0
      %1516 = vmatprep.subr.mxu0 0.0
      %1517 = vmatpush1.msra.mxu0 0.0
      %1518 = vmatprep.subr.mxu0 0.0
      %1519 = vmatpush1.msra.mxu0 0.0
      %1520 = vmatprep.subr.mxu0 0.0
      %1521 = vmatpush1.msra.mxu0 0.0
      %1522 = vmatprep.subr.mxu0 0.0
      %1523 = vmatpush1.msra.mxu0 0.0
      %1524 = vmatprep.subr.mxu0 0.0
      %1525 = vmatpush1.msra.mxu0 0.0
      %1526 = vmatprep.subr.mxu0 0.0
      %1527 = vmatpush1.msra.mxu0 0.0
      %1528 = vmatprep.subr.mxu0 0.0
      %1529 = vmatpush1.msra.mxu0 0.0
      %1530 = vmatprep.mubr.f32.mxu0 0.0
      %1531 = vmatmul.mubr.f32.gmra.mrb[0].mxu0 %v1455
      %v1532 = vpop.f32.mrb[0].mxu0
      %v1533 = vadd.f32 0.0, %v1532
      %v1534 = vpop.f32.mrb[0].mxu0
      %v1535 = vadd.f32 0.0, %v1534
      %1536 = vmatprep.mubr.f32.mxu0 0.0
      %1537 = vmatmul.mubr.f32.gmra.mrb[0].mxu0 %v1458
      %v1538 = vpop.f32.mrb[0].mxu0
      %v1539 = vadd.f32 0.0, %v1538
      %v1540 = vpop.f32.mrb[0].mxu0
      %v1541 = vadd.f32 0.0, %v1540
      %1542 = vmatprep.mubr.f32.mxu0 0.0
      %1543 = vmatmul.mubr.f32.gmra.mrb[0].mxu0 %v1461
      %v1544 = vpop.f32.mrb[0].mxu0
      %v1545 = vadd.f32 0.0, %v1544
      %v1546 = vpop.f32.mrb[0].mxu0
      %v1547 = vadd.f32 0.0, %v1546
      %1548 = vmatprep.mubr.f32.mxu0 0.0
      %1549 = vmatmul.mubr.f32.gmra.mrb[0].mxu0 %v1464
      %v1550 = vpop.f32.mrb[0].mxu0
      %v1551 = vadd.f32 0.0, %v1550
      %v1552 = vpop.f32.mrb[0].mxu0
      %v1553 = vadd.f32 0.0, %v1552
      %1554 = vdwg.mxu0
      %1563 = vrot.lane.b32.xlu0 %v1533, 64
      %v1564 = vpop.permute.xlu0 %1563
      %1565 = vrot.lane.b32.xlu0 %v1535, 64
      %v1566 = vpop.permute.xlu0 %1565
      %1567 = vrot.lane.b32.xlu0 %v1539, 64
      %v1568 = vpop.permute.xlu0 %1567
      %1569 = vrot.lane.b32.xlu0 %v1541, 64
      %v1570 = vpop.permute.xlu0 %1569
      %1571 = vrot.lane.b32.xlu0 %v1545, 64
      %v1572 = vpop.permute.xlu0 %1571
      %1573 = vrot.lane.b32.xlu0 %v1547, 64
      %v1574 = vpop.permute.xlu0 %1573
      %1575 = vrot.lane.b32.xlu0 %v1551, 64
      %v1576 = vpop.permute.xlu0 %1575
      %1577 = vrot.lane.b32.xlu0 %v1553, 64
      %v1578 = vpop.permute.xlu0 %1577
      %v1579 = vsel %vm493, %v1564, %v1566
      %v1580 = vsel %vm493, %v1568, %v1570
      %v1581 = vsel %vm493, %v1572, %v1574
      %v1582 = vsel %vm493, %v1576, %v1578
      %1595 = vst.msk [vmem:[#allocation2] sm:$0xff] %vm535, %v1564
      %1596 = vst [vmem:[#allocation2 + $0x8] sm:$0xff] %v1579
      %1597 = vst.msk [vmem:[#allocation2 + $0x10] sm:$0xff] %vm538, %v1566
      %1598 = vst.msk [vmem:[#allocation2 + $0x18] sm:$0xff] %vm535, %v1568
      %1599 = vst [vmem:[#allocation2 + $0x20] sm:$0xff] %v1580
      %1600 = vst.msk [vmem:[#allocation2 + $0x28] sm:$0xff] %vm538, %v1570
      %1601 = vst.msk [vmem:[#allocation2 + $0x30] sm:$0xff] %vm535, %v1572
      %1602 = vst [vmem:[#allocation2 + $0x38] sm:$0xff] %v1581
      %1603 = vst.msk [vmem:[#allocation2 + $0x40] sm:$0xff] %vm538, %v1574
      %1604 = vst.msk [vmem:[#allocation2 + $0x48] sm:$0xff] %vm535, %v1576
      %1605 = vst [vmem:[#allocation2 + $0x50] sm:$0xff] %v1582
      %1606 = vst.msk [vmem:[#allocation2 + $0x58] sm:$0xff] %vm538, %v1578
      %v1607 = vld [vmem:[#allocation2] sm:$0xff]
      %v1608 = vld [vmem:[#allocation2 + $0x8] sm:$0xff]
      %v1609 = vld [vmem:[#allocation2 + $0x10] sm:$0xff]
      %v1610 = vld [vmem:[#allocation2 + $0x18] sm:$0xff]
      %v1611 = vld [vmem:[#allocation2 + $0x20] sm:$0xff]
      %v1612 = vld [vmem:[#allocation2 + $0x28] sm:$0xff]
      %v1613 = vld [vmem:[#allocation2 + $0x30] sm:$0xff]
      %v1614 = vld [vmem:[#allocation2 + $0x38] sm:$0xff]
      %v1615 = vld [vmem:[#allocation2 + $0x40] sm:$0xff]
      %v1616 = vld [vmem:[#allocation2 + $0x48] sm:$0xff]
      %v1617 = vld [vmem:[#allocation2 + $0x50] sm:$0xff]
      %v1618 = vld [vmem:[#allocation2 + $0x58] sm:$0xff]
      %1631 = vrot.lane.b32.xlu0 %v1607, 60
      %v1632 = vpop.permute.xlu0 %1631
      %1633 = vrot.lane.b32.xlu0 %v1608, 60
      %v1634 = vpop.permute.xlu0 %1633
      %1635 = vrot.lane.b32.xlu0 %v1609, 60
      %v1636 = vpop.permute.xlu0 %1635
      %1637 = vrot.lane.b32.xlu0 %v1610, 60
      %v1638 = vpop.permute.xlu0 %1637
      %1639 = vrot.lane.b32.xlu0 %v1611, 60
      %v1640 = vpop.permute.xlu0 %1639
      %1641 = vrot.lane.b32.xlu0 %v1612, 60
      %v1642 = vpop.permute.xlu0 %1641
      %1643 = vrot.lane.b32.xlu0 %v1613, 60
      %v1644 = vpop.permute.xlu0 %1643
      %1645 = vrot.lane.b32.xlu0 %v1614, 60
      %v1646 = vpop.permute.xlu0 %1645
      %1647 = vrot.lane.b32.xlu0 %v1615, 60
      %v1648 = vpop.permute.xlu0 %1647
      %1649 = vrot.lane.b32.xlu0 %v1616, 60
      %v1650 = vpop.permute.xlu0 %1649
      %1651 = vrot.lane.b32.xlu0 %v1617, 60
      %v1652 = vpop.permute.xlu0 %1651
      %1653 = vrot.lane.b32.xlu0 %v1618, 60
      %v1654 = vpop.permute.xlu0 %1653
      %v1655 = vsel %vm1363, %v1632, %v1634
      %v1656 = vsel %vm1363, %v1634, %v1636
      %v1657 = vsel %vm1363, %v1638, %v1640
      %v1658 = vsel %vm1363, %v1640, %v1642
      %v1659 = vsel %vm1363, %v1644, %v1646
      %v1660 = vsel %vm1363, %v1646, %v1648
      %v1661 = vsel %vm1363, %v1650, %v1652
      %v1662 = vsel %vm1363, %v1652, %v1654
      %v1671 = vmax.f32 %v1533, %v1655
      %v1672 = vmax.f32 %v1535, %v1656
      %v1673 = vmax.f32 %v1539, %v1657
      %v1674 = vmax.f32 %v1541, %v1658
      %v1675 = vmax.f32 %v1545, %v1659
      %v1676 = vmax.f32 %v1547, %v1660
      %v1677 = vmax.f32 %v1551, %v1661
      %v1678 = vmax.f32 %v1553, %v1662
      %1679 = vrot.lane.b32.xlu0 %v1607, 124
      %v1680 = vpop.permute.xlu0 %1679
      %1681 = vrot.lane.b32.xlu0 %v1608, 124
      %v1682 = vpop.permute.xlu0 %1681
      %1683 = vrot.lane.b32.xlu0 %v1609, 124
      %v1684 = vpop.permute.xlu0 %1683
      %1685 = vrot.lane.b32.xlu0 %v1610, 124
      %v1686 = vpop.permute.xlu0 %1685
      %1687 = vrot.lane.b32.xlu0 %v1611, 124
      %v1688 = vpop.permute.xlu0 %1687
      %1689 = vrot.lane.b32.xlu0 %v1612, 124
      %v1690 = vpop.permute.xlu0 %1689
      %1691 = vrot.lane.b32.xlu0 %v1613, 124
      %v1692 = vpop.permute.xlu0 %1691
      %1693 = vrot.lane.b32.xlu0 %v1614, 124
      %v1694 = vpop.permute.xlu0 %1693
      %1695 = vrot.lane.b32.xlu0 %v1615, 124
      %v1696 = vpop.permute.xlu0 %1695
      %1697 = vrot.lane.b32.xlu0 %v1616, 124
      %v1698 = vpop.permute.xlu0 %1697
      %1699 = vrot.lane.b32.xlu0 %v1617, 124
      %v1700 = vpop.permute.xlu0 %1699
      %1701 = vrot.lane.b32.xlu0 %v1618, 124
      %v1702 = vpop.permute.xlu0 %1701
      %v1703 = vsel %vm618, %v1680, %v1682
      %v1704 = vsel %vm618, %v1682, %v1684
      %v1705 = vsel %vm618, %v1686, %v1688
      %v1706 = vsel %vm618, %v1688, %v1690
      %v1707 = vsel %vm618, %v1692, %v1694
      %v1708 = vsel %vm618, %v1694, %v1696
      %v1709 = vsel %vm618, %v1698, %v1700
      %v1710 = vsel %vm618, %v1700, %v1702
      %v1723 = vmax.f32 %v1607, %v1703
      %v1724 = vmax.f32 %v1608, %v1704
      %v1725 = vmax.f32 %v1609, %v1684
      %v1726 = vmax.f32 %v1610, %v1705
      %v1727 = vmax.f32 %v1611, %v1706
      %v1728 = vmax.f32 %v1612, %v1690
      %v1729 = vmax.f32 %v1613, %v1707
      %v1730 = vmax.f32 %v1614, %v1708
      %v1731 = vmax.f32 %v1615, %v1696
      %v1732 = vmax.f32 %v1616, %v1709
      %v1733 = vmax.f32 %v1617, %v1710
      %v1734 = vmax.f32 %v1618, %v1702
      %1747 = vrot.lane.b32.xlu0 %v1723, 56
      %v1748 = vpop.permute.xlu0 %1747
      %1749 = vrot.lane.b32.xlu0 %v1724, 56
      %v1750 = vpop.permute.xlu0 %1749
      %1751 = vrot.lane.b32.xlu0 %v1725, 56
      %v1752 = vpop.permute.xlu0 %1751
      %1753 = vrot.lane.b32.xlu0 %v1726, 56
      %v1754 = vpop.permute.xlu0 %1753
      %1755 = vrot.lane.b32.xlu0 %v1727, 56
      %v1756 = vpop.permute.xlu0 %1755
      %1757 = vrot.lane.b32.xlu0 %v1728, 56
      %v1758 = vpop.permute.xlu0 %1757
      %1759 = vrot.lane.b32.xlu0 %v1729, 56
      %v1760 = vpop.permute.xlu0 %1759
      %1761 = vrot.lane.b32.xlu0 %v1730, 56
      %v1762 = vpop.permute.xlu0 %1761
      %1763 = vrot.lane.b32.xlu0 %v1731, 56
      %v1764 = vpop.permute.xlu0 %1763
      %1765 = vrot.lane.b32.xlu0 %v1732, 56
      %v1766 = vpop.permute.xlu0 %1765
      %1767 = vrot.lane.b32.xlu0 %v1733, 56
      %v1768 = vpop.permute.xlu0 %1767
      %1769 = vrot.lane.b32.xlu0 %v1734, 56
      %v1770 = vpop.permute.xlu0 %1769
      %vm1771 = vcmask 457728
      %v1772 = vsel %vm1771, %v1748, %v1750
      %v1773 = vsel %vm1771, %v1750, %v1752
      %v1774 = vsel %vm1771, %v1754, %v1756
      %v1775 = vsel %vm1771, %v1756, %v1758
      %v1776 = vsel %vm1771, %v1760, %v1762
      %v1777 = vsel %vm1771, %v1762, %v1764
      %v1778 = vsel %vm1771, %v1766, %v1768
      %v1779 = vsel %vm1771, %v1768, %v1770
      %v1788 = vmax.f32 %v1671, %v1772
      %v1789 = vmax.f32 %v1672, %v1773
      %v1790 = vmax.f32 %v1673, %v1774
      %v1791 = vmax.f32 %v1674, %v1775
      %v1792 = vmax.f32 %v1675, %v1776
      %v1793 = vmax.f32 %v1676, %v1777
      %v1794 = vmax.f32 %v1677, %v1778
      %v1795 = vmax.f32 %v1678, %v1779
      %v1796 = vld [vmem:[%s9] sm:$0xff]
      %v1797 = vld [vmem:[%s9 + $0x8] sm:$0xff]
      %v1798 = vld [vmem:[%s9 + $0x10] sm:$0xff]
      %v1799 = vld [vmem:[%s9 + $0x18] sm:$0xff]
      %1801 = vset.pattern.permute.xlu0 0
      %1802 = vperm.xlu0 %1801, %v1796
      %v1803 = vpop.permute.xlu0 %1802
      %1806 = vset.pattern.permute.xlu0 0
      %1807 = vperm.xlu0 %1806, %v1797
      %v1808 = vpop.permute.xlu0 %1807
      %1811 = vset.pattern.permute.xlu0 0
      %1812 = vperm.xlu0 %1811, %v1798
      %v1813 = vpop.permute.xlu0 %1812
      %1816 = vset.pattern.permute.xlu0 0
      %1817 = vperm.xlu0 %1816, %v1799
      %v1818 = vpop.permute.xlu0 %1817
      %v1820 = vadd.f32 %v1788, %v1803
      %v1821 = vadd.f32 %v1789, %v1803
      %v1822 = vadd.f32 %v1790, %v1808
      %v1823 = vadd.f32 %v1791, %v1808
      %v1824 = vadd.f32 %v1792, %v1813
      %v1825 = vadd.f32 %v1793, %v1813
      %v1826 = vadd.f32 %v1794, %v1818
      %v1827 = vadd.f32 %v1795, %v1818
      %v1828 = vmax.f32 %v1820, 0.0
      %v1829 = vmax.f32 %v1821, 0.0
      %v1830 = vmax.f32 %v1822, 0.0
      %v1831 = vmax.f32 %v1823, 0.0
      %v1832 = vmax.f32 %v1824, 0.0
      %v1833 = vmax.f32 %v1825, 0.0
      %v1834 = vmax.f32 %v1826, 0.0
      %v1835 = vmax.f32 %v1827, 0.0
      %v1836 = vld [vmem:[%s3] sm:$0x3]
      %v1838 = vlaneseq
      %v1839 = vshrl.u32 %v1838, 7
      %v1840 = vsub.s32 0, %v1839
      %v1841 = vrot.slane %v1836, %v1840
      %v1842 = vlaneseq
      %v1843 = vshrl.u32 %v1842, 7
      %v1844 = vsub.s32 1, %v1843
      %v1845 = vrot.slane %v1836, %v1844
      %v1848 = vmul.f32 %v1828, %v1841
      %v1849 = vmul.f32 %v1829, %v1845
      %v1850 = vmul.f32 %v1830, %v1841
      %v1851 = vmul.f32 %v1831, %v1845
      %v1852 = vmul.f32 %v1832, %v1841
      %v1853 = vmul.f32 %v1833, %v1845
      %v1854 = vmul.f32 %v1834, %v1841
      %v1855 = vmul.f32 %v1835, %v1845
      %1864 = vrot.lane.b32.xlu0 %v1848, 64
      %v1865 = vpop.permute.xlu0 %1864
      %1866 = vrot.lane.b32.xlu0 %v1849, 64
      %v1867 = vpop.permute.xlu0 %1866
      %1868 = vrot.lane.b32.xlu0 %v1850, 64
      %v1869 = vpop.permute.xlu0 %1868
      %1870 = vrot.lane.b32.xlu0 %v1851, 64
      %v1871 = vpop.permute.xlu0 %1870
      %1872 = vrot.lane.b32.xlu0 %v1852, 64
      %v1873 = vpop.permute.xlu0 %1872
      %1874 = vrot.lane.b32.xlu0 %v1853, 64
      %v1875 = vpop.permute.xlu0 %1874
      %1876 = vrot.lane.b32.xlu0 %v1854, 64
      %v1877 = vpop.permute.xlu0 %1876
      %1878 = vrot.lane.b32.xlu0 %v1855, 64
      %v1879 = vpop.permute.xlu0 %1878
      %v1880 = vsel %vm493, %v1865, %v1867
      %v1881 = vsel %vm493, %v1869, %v1871
      %v1882 = vsel %vm493, %v1873, %v1875
      %v1883 = vsel %vm493, %v1877, %v1879
      %1896 = vst.msk [vmem:[#allocation2] sm:$0xff] %vm535, %v1865
      %1897 = vst [vmem:[#allocation2 + $0x8] sm:$0xff] %v1880
      %1898 = vst.msk [vmem:[#allocation2 + $0x10] sm:$0xff] %vm538, %v1867
      %1899 = vst.msk [vmem:[#allocation2 + $0x18] sm:$0xff] %vm535, %v1869
      %1900 = vst [vmem:[#allocation2 + $0x20] sm:$0xff] %v1881
      %1901 = vst.msk [vmem:[#allocation2 + $0x28] sm:$0xff] %vm538, %v1871
      %1902 = vst.msk [vmem:[#allocation2 + $0x30] sm:$0xff] %vm535, %v1873
      %1903 = vst [vmem:[#allocation2 + $0x38] sm:$0xff] %v1882
      %1904 = vst.msk [vmem:[#allocation2 + $0x40] sm:$0xff] %vm538, %v1875
      %1905 = vst.msk [vmem:[#allocation2 + $0x48] sm:$0xff] %vm535, %v1877
      %1906 = vst [vmem:[#allocation2 + $0x50] sm:$0xff] %v1883
      %1907 = vst.msk [vmem:[#allocation2 + $0x58] sm:$0xff] %vm538, %v1879
      %v1908 = vld [vmem:[#allocation2] sm:$0xff]
      %v1909 = vld [vmem:[#allocation2 + $0x8] sm:$0xff]
      %v1910 = vld [vmem:[#allocation2 + $0x18] sm:$0xff]
      %v1911 = vld [vmem:[#allocation2 + $0x20] sm:$0xff]
      %v1912 = vld [vmem:[#allocation2 + $0x30] sm:$0xff]
      %v1913 = vld [vmem:[#allocation2 + $0x38] sm:$0xff]
      %v1914 = vld [vmem:[#allocation2 + $0x48] sm:$0xff]
      %v1915 = vld [vmem:[#allocation2 + $0x50] sm:$0xff]
      %v1916 = vld [vmem:[#allocation2 + $0x10] sm:$0xff]
      %v1917 = vld [vmem:[#allocation2 + $0x28] sm:$0xff]
      %v1918 = vld [vmem:[#allocation2 + $0x40] sm:$0xff]
      %v1919 = vld [vmem:[#allocation2 + $0x58] sm:$0xff]
      %1920 = vrot.lane.b32.xlu0 %v1848, 48
      %v1921 = vpop.permute.xlu0 %1920
      %1922 = vrot.lane.b32.xlu0 %v1849, 48
      %v1923 = vpop.permute.xlu0 %1922
      %1924 = vrot.lane.b32.xlu0 %v1850, 48
      %v1925 = vpop.permute.xlu0 %1924
      %1926 = vrot.lane.b32.xlu0 %v1851, 48
      %v1927 = vpop.permute.xlu0 %1926
      %1928 = vrot.lane.b32.xlu0 %v1852, 48
      %v1929 = vpop.permute.xlu0 %1928
      %1930 = vrot.lane.b32.xlu0 %v1853, 48
      %v1931 = vpop.permute.xlu0 %1930
      %1932 = vrot.lane.b32.xlu0 %v1854, 48
      %v1933 = vpop.permute.xlu0 %1932
      %1934 = vrot.lane.b32.xlu0 %v1855, 48
      %v1935 = vpop.permute.xlu0 %1934
      %v1936 = vsel %vm1082, %v1921, %v1923
      %v1937 = vsel %vm1082, %v1925, %v1927
      %v1938 = vsel %vm1082, %v1929, %v1931
      %v1939 = vsel %vm1082, %v1933, %v1935
      %1952 = vrot.lane.b32.xlu0 %v1908, 96
      %v1953 = vpop.permute.xlu0 %1952
      %1954 = vrot.lane.b32.xlu0 %v1909, 96
      %v1955 = vpop.permute.xlu0 %1954
      %1956 = vrot.lane.b32.xlu0 %v1916, 96
      %v1957 = vpop.permute.xlu0 %1956
      %1958 = vrot.lane.b32.xlu0 %v1910, 96
      %v1959 = vpop.permute.xlu0 %1958
      %1960 = vrot.lane.b32.xlu0 %v1911, 96
      %v1961 = vpop.permute.xlu0 %1960
      %1962 = vrot.lane.b32.xlu0 %v1917, 96
      %v1963 = vpop.permute.xlu0 %1962
      %1964 = vrot.lane.b32.xlu0 %v1912, 96
      %v1965 = vpop.permute.xlu0 %1964
      %1966 = vrot.lane.b32.xlu0 %v1913, 96
      %v1967 = vpop.permute.xlu0 %1966
      %1968 = vrot.lane.b32.xlu0 %v1918, 96
      %v1969 = vpop.permute.xlu0 %1968
      %1970 = vrot.lane.b32.xlu0 %v1914, 96
      %v1971 = vpop.permute.xlu0 %1970
      %1972 = vrot.lane.b32.xlu0 %v1915, 96
      %v1973 = vpop.permute.xlu0 %1972
      %1974 = vrot.lane.b32.xlu0 %v1919, 96
      %v1975 = vpop.permute.xlu0 %1974
      %v1976 = vsel %vm768, %v1953, %v1955
      %v1977 = vsel %vm768, %v1955, %v1957
      %v1978 = vsel %vm768, %v1959, %v1961
      %v1979 = vsel %vm768, %v1961, %v1963
      %v1980 = vsel %vm768, %v1965, %v1967
      %v1981 = vsel %vm768, %v1967, %v1969
      %v1982 = vsel %vm768, %v1971, %v1973
      %v1983 = vsel %vm768, %v1973, %v1975
      %v1984 = vld [vmem:[%s10] sm:$0xff]
      %v1985 = vld [vmem:[%s10 + $0x8] sm:$0xff]
      %v1986 = vld [vmem:[%s10 + $0x10] sm:$0xff]
      %v1987 = vld [vmem:[%s10 + $0x18] sm:$0xff]
      %v1988 = vld [vmem:[%s10 + $0x20] sm:$0xff]
      %v1989 = vld [vmem:[%s10 + $0x28] sm:$0xff]
      %v1990 = vld [vmem:[%s10 + $0x30] sm:$0xff]
      %v1991 = vld [vmem:[%s10 + $0x38] sm:$0xff]
      %1992 = vrot.lane.b32.xlu0 %v1908, 80
      %v1993 = vpop.permute.xlu0 %1992
      %1994 = vrot.lane.b32.xlu0 %v1909, 80
      %v1995 = vpop.permute.xlu0 %1994
      %1996 = vrot.lane.b32.xlu0 %v1910, 80
      %v1997 = vpop.permute.xlu0 %1996
      %1998 = vrot.lane.b32.xlu0 %v1911, 80
      %v1999 = vpop.permute.xlu0 %1998
      %2000 = vrot.lane.b32.xlu0 %v1912, 80
      %v2001 = vpop.permute.xlu0 %2000
      %2002 = vrot.lane.b32.xlu0 %v1913, 80
      %v2003 = vpop.permute.xlu0 %2002
      %2004 = vrot.lane.b32.xlu0 %v1914, 80
      %v2005 = vpop.permute.xlu0 %2004
      %2006 = vrot.lane.b32.xlu0 %v1915, 80
      %v2007 = vpop.permute.xlu0 %2006
      %2008 = vrot.lane.b32.xlu0 %v1921, 80
      %v2009 = vpop.permute.xlu0 %2008
      %2010 = vrot.lane.b32.xlu0 %v1936, 80
      %v2011 = vpop.permute.xlu0 %2010
      %2012 = vrot.lane.b32.xlu0 %v1925, 80
      %v2013 = vpop.permute.xlu0 %2012
      %2014 = vrot.lane.b32.xlu0 %v1937, 80
      %v2015 = vpop.permute.xlu0 %2014
      %2016 = vrot.lane.b32.xlu0 %v1929, 80
      %v2017 = vpop.permute.xlu0 %2016
      %2018 = vrot.lane.b32.xlu0 %v1938, 80
      %v2019 = vpop.permute.xlu0 %2018
      %2020 = vrot.lane.b32.xlu0 %v1933, 80
      %v2021 = vpop.permute.xlu0 %2020
      %2022 = vrot.lane.b32.xlu0 %v1939, 80
      %v2023 = vpop.permute.xlu0 %2022
      %2024 = vrot.lane.b32.xlu0 %v1976, 80
      %v2025 = vpop.permute.xlu0 %2024
      %2026 = vrot.lane.b32.xlu0 %v1977, 80
      %v2027 = vpop.permute.xlu0 %2026
      %2028 = vrot.lane.b32.xlu0 %v1978, 80
      %v2029 = vpop.permute.xlu0 %2028
      %2030 = vrot.lane.b32.xlu0 %v1979, 80
      %v2031 = vpop.permute.xlu0 %2030
      %2032 = vrot.lane.b32.xlu0 %v1980, 80
      %v2033 = vpop.permute.xlu0 %2032
      %2034 = vrot.lane.b32.xlu0 %v1981, 80
      %v2035 = vpop.permute.xlu0 %2034
      %2036 = vrot.lane.b32.xlu0 %v1982, 80
      %v2037 = vpop.permute.xlu0 %2036
      %2038 = vrot.lane.b32.xlu0 %v1983, 80
      %v2039 = vpop.permute.xlu0 %2038
      %vm2040 = vcmask 654336
      %v2041 = vsel %vm2040, %v1993, %v1995
      %v2042 = vsel %vm2040, %v1997, %v1999
      %v2043 = vsel %vm2040, %v2001, %v2003
      %v2044 = vsel %vm2040, %v2005, %v2007
      %v2045 = vsel %vm2040, %v2009, %v2011
      %v2046 = vsel %vm2040, %v2013, %v2015
      %v2047 = vsel %vm2040, %v2017, %v2019
      %v2048 = vsel %vm2040, %v2021, %v2023
      %v2049 = vsel %vm2040, %v2025, %v2027
      %v2050 = vsel %vm2040, %v2029, %v2031
      %v2051 = vsel %vm2040, %v2033, %v2035
      %v2052 = vsel %vm2040, %v2037, %v2039
      %v2078 = vsel %vm768, %v1984, 0
      %v2081 = vsel %vm768, %v1985, 0
      %v2084 = vsel %vm768, %v1986, 0
      %v2087 = vsel %vm768, %v1987, 0
      %v2090 = vsel %vm768, %v1988, 0
      %v2093 = vsel %vm768, %v1989, 0
      %v2096 = vsel %vm768, %v1990, 0
      %v2099 = vsel %vm768, %v1991, 0
      %2101 = vmatprep.subr.mxu0 %v1995
      %2102 = vmatpush1.msra.mxu0 %v2041
      %2103 = vmatprep.subr.mxu0 %v1999
      %2104 = vmatpush1.msra.mxu0 %v2042
      %2105 = vmatprep.subr.mxu0 %v2003
      %2106 = vmatpush1.msra.mxu0 %v2043
      %2107 = vmatprep.subr.mxu0 %v2007
      %2108 = vmatpush1.msra.mxu0 %v2044
      %2109 = vmatprep.subr.mxu0 %v2011
      %2110 = vmatpush1.msra.mxu0 %v2045
      %2111 = vmatprep.subr.mxu0 %v2015
      %2112 = vmatpush1.msra.mxu0 %v2046
      %2113 = vmatprep.subr.mxu0 %v2019
      %2114 = vmatpush1.msra.mxu0 %v2047
      %2115 = vmatprep.subr.mxu0 %v2023
      %2116 = vmatpush1.msra.mxu0 %v2048
      %2117 = vmatprep.subr.mxu0 %v2027
      %2118 = vmatpush1.msra.mxu0 %v2049
      %2119 = vmatprep.subr.mxu0 %v2031
      %2120 = vmatpush1.msra.mxu0 %v2050
      %2121 = vmatprep.subr.mxu0 %v2035
      %2122 = vmatpush1.msra.mxu0 %v2051
      %2123 = vmatprep.subr.mxu0 %v2039
      %2124 = vmatpush1.msra.mxu0 %v2052
      %2125 = vmatprep.subr.mxu0 0.0
      %2126 = vmatpush1.msra.mxu0 0.0
      %2127 = vmatprep.subr.mxu0 0.0
      %2128 = vmatpush1.msra.mxu0 0.0
      %2129 = vmatprep.subr.mxu0 0.0
      %2130 = vmatpush1.msra.mxu0 0.0
      %2131 = vmatprep.subr.mxu0 0.0
      %2132 = vmatpush1.msra.mxu0 0.0
      %2133 = vmatprep.subr.mxu0 0.0
      %2134 = vmatpush1.msra.mxu0 0.0
      %2135 = vmatprep.subr.mxu0 0.0
      %2136 = vmatpush1.msra.mxu0 0.0
      %2137 = vmatprep.subr.mxu0 0.0
      %2138 = vmatpush1.msra.mxu0 0.0
      %2139 = vmatprep.subr.mxu0 0.0
      %2140 = vmatpush1.msra.mxu0 0.0
      %2141 = vmatprep.subr.mxu0 0.0
      %2142 = vmatpush1.msra.mxu0 0.0
      %2143 = vmatprep.subr.mxu0 0.0
      %2144 = vmatpush1.msra.mxu0 0.0
      %2145 = vmatprep.subr.mxu0 0.0
      %2146 = vmatpush1.msra.mxu0 0.0
      %2147 = vmatprep.subr.mxu0 0.0
      %2148 = vmatpush1.msra.mxu0 0.0
      %2149 = vmatprep.subr.mxu0 0.0
      %2150 = vmatpush1.msra.mxu0 0.0
      %2151 = vmatprep.subr.mxu0 0.0
      %2152 = vmatpush1.msra.mxu0 0.0
      %2153 = vmatprep.subr.mxu0 0.0
      %2154 = vmatpush1.msra.mxu0 0.0
      %2155 = vmatprep.subr.mxu0 0.0
      %2156 = vmatpush1.msra.mxu0 0.0
      %2157 = vmatprep.subr.mxu0 0.0
      %2158 = vmatpush1.msra.mxu0 0.0
      %2159 = vmatprep.subr.mxu0 0.0
      %2160 = vmatpush1.msra.mxu0 0.0
      %2161 = vmatprep.subr.mxu0 0.0
      %2162 = vmatpush1.msra.mxu0 0.0
      %2163 = vmatprep.subr.mxu0 0.0
      %2164 = vmatpush1.msra.mxu0 0.0
      %2165 = vmatprep.mubr.f32.mxu0 0.0
      %2166 = vmatmul.mubr.f32.gmra.mrb[0].mxu0 %v2078
      %v2167 = vpop.f32.mrb[0].mxu0
      %v2168 = vadd.f32 0.0, %v2167
      %v2169 = vpop.f32.mrb[0].mxu0
      %v2170 = vadd.f32 0.0, %v2169
      %2171 = vmatprep.mubr.f32.mxu0 0.0
      %2172 = vmatmul.mubr.f32.gmra.mrb[0].mxu0 %v2081
      %v2173 = vpop.f32.mrb[0].mxu0
      %v2174 = vadd.f32 0.0, %v2173
      %v2175 = vpop.f32.mrb[0].mxu0
      %v2176 = vadd.f32 0.0, %v2175
      %2177 = vmatprep.mubr.f32.mxu0 0.0
      %2178 = vmatmul.mubr.f32.gmra.mrb[0].mxu0 %v2084
      %v2179 = vpop.f32.mrb[0].mxu0
      %v2180 = vadd.f32 0.0, %v2179
      %v2181 = vpop.f32.mrb[0].mxu0
      %v2182 = vadd.f32 0.0, %v2181
      %2183 = vmatprep.mubr.f32.mxu0 0.0
      %2184 = vmatmul.mubr.f32.gmra.mrb[0].mxu0 %v2087
      %v2185 = vpop.f32.mrb[0].mxu0
      %v2186 = vadd.f32 0.0, %v2185
      %v2187 = vpop.f32.mrb[0].mxu0
      %v2188 = vadd.f32 0.0, %v2187
      %2189 = vmatprep.mubr.f32.mxu0 0.0
      %2190 = vmatmul.mubr.f32.gmra.mrb[0].mxu0 %v2090
      %v2191 = vpop.f32.mrb[0].mxu0
      %v2192 = vadd.f32 0.0, %v2191
      %v2193 = vpop.f32.mrb[0].mxu0
      %v2194 = vadd.f32 0.0, %v2193
      %2195 = vmatprep.mubr.f32.mxu0 0.0
      %2196 = vmatmul.mubr.f32.gmra.mrb[0].mxu0 %v2093
      %v2197 = vpop.f32.mrb[0].mxu0
      %v2198 = vadd.f32 0.0, %v2197
      %v2199 = vpop.f32.mrb[0].mxu0
      %v2200 = vadd.f32 0.0, %v2199
      %2201 = vmatprep.mubr.f32.mxu0 0.0
      %2202 = vmatmul.mubr.f32.gmra.mrb[0].mxu0 %v2096
      %v2203 = vpop.f32.mrb[0].mxu0
      %v2204 = vadd.f32 0.0, %v2203
      %v2205 = vpop.f32.mrb[0].mxu0
      %v2206 = vadd.f32 0.0, %v2205
      %2207 = vmatprep.mubr.f32.mxu0 0.0
      %2208 = vmatmul.mubr.f32.gmra.mrb[0].mxu0 %v2099
      %v2209 = vpop.f32.mrb[0].mxu0
      %v2210 = vadd.f32 0.0, %v2209
      %v2211 = vpop.f32.mrb[0].mxu0
      %v2212 = vadd.f32 0.0, %v2211
      %2213 = vdwg.mxu0
      %2230 = vrot.lane.b32.xlu0 %v2168, 64
      %v2231 = vpop.permute.xlu0 %2230
      %2232 = vrot.lane.b32.xlu0 %v2170, 64
      %v2233 = vpop.permute.xlu0 %2232
      %2234 = vrot.lane.b32.xlu0 %v2174, 64
      %v2235 = vpop.permute.xlu0 %2234
      %2236 = vrot.lane.b32.xlu0 %v2176, 64
      %v2237 = vpop.permute.xlu0 %2236
      %2238 = vrot.lane.b32.xlu0 %v2180, 64
      %v2239 = vpop.permute.xlu0 %2238
      %2240 = vrot.lane.b32.xlu0 %v2182, 64
      %v2241 = vpop.permute.xlu0 %2240
      %2242 = vrot.lane.b32.xlu0 %v2186, 64
      %v2243 = vpop.permute.xlu0 %2242
      %2244 = vrot.lane.b32.xlu0 %v2188, 64
      %v2245 = vpop.permute.xlu0 %2244
      %2246 = vrot.lane.b32.xlu0 %v2192, 64
      %v2247 = vpop.permute.xlu0 %2246
      %2248 = vrot.lane.b32.xlu0 %v2194, 64
      %v2249 = vpop.permute.xlu0 %2248
      %2250 = vrot.lane.b32.xlu0 %v2198, 64
      %v2251 = vpop.permute.xlu0 %2250
      %2252 = vrot.lane.b32.xlu0 %v2200, 64
      %v2253 = vpop.permute.xlu0 %2252
      %2254 = vrot.lane.b32.xlu0 %v2204, 64
      %v2255 = vpop.permute.xlu0 %2254
      %2256 = vrot.lane.b32.xlu0 %v2206, 64
      %v2257 = vpop.permute.xlu0 %2256
      %2258 = vrot.lane.b32.xlu0 %v2210, 64
      %v2259 = vpop.permute.xlu0 %2258
      %2260 = vrot.lane.b32.xlu0 %v2212, 64
      %v2261 = vpop.permute.xlu0 %2260
      %v2262 = vsel %vm493, %v2231, %v2233
      %v2263 = vsel %vm493, %v2235, %v2237
      %v2264 = vsel %vm493, %v2239, %v2241
      %v2265 = vsel %vm493, %v2243, %v2245
      %v2266 = vsel %vm493, %v2247, %v2249
      %v2267 = vsel %vm493, %v2251, %v2253
      %v2268 = vsel %vm493, %v2255, %v2257
      %v2269 = vsel %vm493, %v2259, %v2261
      %2294 = vst.msk [vmem:[#allocation2] sm:$0xff] %vm535, %v2231
      %2295 = vst [vmem:[#allocation2 + $0x8] sm:$0xff] %v2262
      %2296 = vst.msk [vmem:[#allocation2 + $0x10] sm:$0xff] %vm538, %v2233
      %2297 = vst.msk [vmem:[#allocation2 + $0x18] sm:$0xff] %vm535, %v2235
      %2298 = vst [vmem:[#allocation2 + $0x20] sm:$0xff] %v2263
      %2299 = vst.msk [vmem:[#allocation2 + $0x28] sm:$0xff] %vm538, %v2237
      %2300 = vst.msk [vmem:[#allocation2 + $0x30] sm:$0xff] %vm535, %v2239
      %2301 = vst [vmem:[#allocation2 + $0x38] sm:$0xff] %v2264
      %2302 = vst.msk [vmem:[#allocation2 + $0x40] sm:$0xff] %vm538, %v2241
      %2303 = vst.msk [vmem:[#allocation2 + $0x48] sm:$0xff] %vm535, %v2243
      %2304 = vst [vmem:[#allocation2 + $0x50] sm:$0xff] %v2265
      %2305 = vst.msk [vmem:[#allocation2 + $0x58] sm:$0xff] %vm538, %v2245
      %2306 = vst.msk [vmem:[#allocation2 + $0x60] sm:$0xff] %vm535, %v2247
      %2307 = vst [vmem:[#allocation2 + $0x68] sm:$0xff] %v2266
      %2308 = vst.msk [vmem:[#allocation2 + $0x70] sm:$0xff] %vm538, %v2249
      %2309 = vst.msk [vmem:[#allocation2 + $0x78] sm:$0xff] %vm535, %v2251
      %2310 = vst [vmem:[#allocation2 + $0x80] sm:$0xff] %v2267
      %2311 = vst.msk [vmem:[#allocation2 + $0x88] sm:$0xff] %vm538, %v2253
      %2312 = vst.msk [vmem:[#allocation2 + $0x90] sm:$0xff] %vm535, %v2255
      %2313 = vst [vmem:[#allocation2 + $0x98] sm:$0xff] %v2268
      %2314 = vst.msk [vmem:[#allocation2 + $0xa0] sm:$0xff] %vm538, %v2257
      %2315 = vst.msk [vmem:[#allocation2 + $0xa8] sm:$0xff] %vm535, %v2259
      %2316 = vst [vmem:[#allocation2 + $0xb0] sm:$0xff] %v2269
      %2317 = vst.msk [vmem:[#allocation2 + $0xb8] sm:$0xff] %vm538, %v2261
      %v2318 = vld [vmem:[#allocation2] sm:$0xff]
      %v2319 = vld [vmem:[#allocation2 + $0x8] sm:$0xff]
      %v2320 = vld [vmem:[#allocation2 + $0x10] sm:$0xff]
      %v2321 = vld [vmem:[#allocation2 + $0x18] sm:$0xff]
      %v2322 = vld [vmem:[#allocation2 + $0x20] sm:$0xff]
      %v2323 = vld [vmem:[#allocation2 + $0x28] sm:$0xff]
      %v2324 = vld [vmem:[#allocation2 + $0x30] sm:$0xff]
      %v2325 = vld [vmem:[#allocation2 + $0x38] sm:$0xff]
      %v2326 = vld [vmem:[#allocation2 + $0x40] sm:$0xff]
      %v2327 = vld [vmem:[#allocation2 + $0x48] sm:$0xff]
      %v2328 = vld [vmem:[#allocation2 + $0x50] sm:$0xff]
      %v2329 = vld [vmem:[#allocation2 + $0x58] sm:$0xff]
      %v2330 = vld [vmem:[#allocation2 + $0x60] sm:$0xff]
      %v2331 = vld [vmem:[#allocation2 + $0x68] sm:$0xff]
      %v2332 = vld [vmem:[#allocation2 + $0x70] sm:$0xff]
      %v2333 = vld [vmem:[#allocation2 + $0x78] sm:$0xff]
      %v2334 = vld [vmem:[#allocation2 + $0x80] sm:$0xff]
      %v2335 = vld [vmem:[#allocation2 + $0x88] sm:$0xff]
      %v2336 = vld [vmem:[#allocation2 + $0x90] sm:$0xff]
      %v2337 = vld [vmem:[#allocation2 + $0x98] sm:$0xff]
      %v2338 = vld [vmem:[#allocation2 + $0xa0] sm:$0xff]
      %v2339 = vld [vmem:[#allocation2 + $0xa8] sm:$0xff]
      %v2340 = vld [vmem:[#allocation2 + $0xb0] sm:$0xff]
      %v2341 = vld [vmem:[#allocation2 + $0xb8] sm:$0xff]
      %2366 = vrot.lane.b32.xlu0 %v2318, 48
      %v2367 = vpop.permute.xlu0 %2366
      %2368 = vrot.lane.b32.xlu0 %v2319, 48
      %v2369 = vpop.permute.xlu0 %2368
      %2370 = vrot.lane.b32.xlu0 %v2320, 48
      %v2371 = vpop.permute.xlu0 %2370
      %2372 = vrot.lane.b32.xlu0 %v2321, 48
      %v2373 = vpop.permute.xlu0 %2372
      %2374 = vrot.lane.b32.xlu0 %v2322, 48
      %v2375 = vpop.permute.xlu0 %2374
      %2376 = vrot.lane.b32.xlu0 %v2323, 48
      %v2377 = vpop.permute.xlu0 %2376
      %2378 = vrot.lane.b32.xlu0 %v2324, 48
      %v2379 = vpop.permute.xlu0 %2378
      %2380 = vrot.lane.b32.xlu0 %v2325, 48
      %v2381 = vpop.permute.xlu0 %2380
      %2382 = vrot.lane.b32.xlu0 %v2326, 48
      %v2383 = vpop.permute.xlu0 %2382
      %2384 = vrot.lane.b32.xlu0 %v2327, 48
      %v2385 = vpop.permute.xlu0 %2384
      %2386 = vrot.lane.b32.xlu0 %v2328, 48
      %v2387 = vpop.permute.xlu0 %2386
      %2388 = vrot.lane.b32.xlu0 %v2329, 48
      %v2389 = vpop.permute.xlu0 %2388
      %2390 = vrot.lane.b32.xlu0 %v2330, 48
      %v2391 = vpop.permute.xlu0 %2390
      %2392 = vrot.lane.b32.xlu0 %v2331, 48
      %v2393 = vpop.permute.xlu0 %2392
      %2394 = vrot.lane.b32.xlu0 %v2332, 48
      %v2395 = vpop.permute.xlu0 %2394
      %2396 = vrot.lane.b32.xlu0 %v2333, 48
      %v2397 = vpop.permute.xlu0 %2396
      %2398 = vrot.lane.b32.xlu0 %v2334, 48
      %v2399 = vpop.permute.xlu0 %2398
      %2400 = vrot.lane.b32.xlu0 %v2335, 48
      %v2401 = vpop.permute.xlu0 %2400
      %2402 = vrot.lane.b32.xlu0 %v2336, 48
      %v2403 = vpop.permute.xlu0 %2402
      %2404 = vrot.lane.b32.xlu0 %v2337, 48
      %v2405 = vpop.permute.xlu0 %2404
      %2406 = vrot.lane.b32.xlu0 %v2338, 48
      %v2407 = vpop.permute.xlu0 %2406
      %2408 = vrot.lane.b32.xlu0 %v2339, 48
      %v2409 = vpop.permute.xlu0 %2408
      %2410 = vrot.lane.b32.xlu0 %v2340, 48
      %v2411 = vpop.permute.xlu0 %2410
      %2412 = vrot.lane.b32.xlu0 %v2341, 48
      %v2413 = vpop.permute.xlu0 %2412
      %v2414 = vsel %vm1082, %v2367, %v2369
      %v2415 = vsel %vm1082, %v2369, %v2371
      %v2416 = vsel %vm1082, %v2373, %v2375
      %v2417 = vsel %vm1082, %v2375, %v2377
      %v2418 = vsel %vm1082, %v2379, %v2381
      %v2419 = vsel %vm1082, %v2381, %v2383
      %v2420 = vsel %vm1082, %v2385, %v2387
      %v2421 = vsel %vm1082, %v2387, %v2389
      %v2422 = vsel %vm1082, %v2391, %v2393
      %v2423 = vsel %vm1082, %v2393, %v2395
      %v2424 = vsel %vm1082, %v2397, %v2399
      %v2425 = vsel %vm1082, %v2399, %v2401
      %v2426 = vsel %vm1082, %v2403, %v2405
      %v2427 = vsel %vm1082, %v2405, %v2407
      %v2428 = vsel %vm1082, %v2409, %v2411
      %v2429 = vsel %vm1082, %v2411, %v2413
      %v2446 = vmax.f32 %v2168, %v2414
      %v2447 = vmax.f32 %v2170, %v2415
      %v2448 = vmax.f32 %v2174, %v2416
      %v2449 = vmax.f32 %v2176, %v2417
      %v2450 = vmax.f32 %v2180, %v2418
      %v2451 = vmax.f32 %v2182, %v2419
      %v2452 = vmax.f32 %v2186, %v2420
      %v2453 = vmax.f32 %v2188, %v2421
      %v2454 = vmax.f32 %v2192, %v2422
      %v2455 = vmax.f32 %v2194, %v2423
      %v2456 = vmax.f32 %v2198, %v2424
      %v2457 = vmax.f32 %v2200, %v2425
      %v2458 = vmax.f32 %v2204, %v2426
      %v2459 = vmax.f32 %v2206, %v2427
      %v2460 = vmax.f32 %v2210, %v2428
      %v2461 = vmax.f32 %v2212, %v2429
      %2462 = vrot.lane.b32.xlu0 %v2318, 112
      %v2463 = vpop.permute.xlu0 %2462
      %2464 = vrot.lane.b32.xlu0 %v2319, 112
      %v2465 = vpop.permute.xlu0 %2464
      %2466 = vrot.lane.b32.xlu0 %v2320, 112
      %v2467 = vpop.permute.xlu0 %2466
      %2468 = vrot.lane.b32.xlu0 %v2321, 112
      %v2469 = vpop.permute.xlu0 %2468
      %2470 = vrot.lane.b32.xlu0 %v2322, 112
      %v2471 = vpop.permute.xlu0 %2470
      %2472 = vrot.lane.b32.xlu0 %v2323, 112
      %v2473 = vpop.permute.xlu0 %2472
      %2474 = vrot.lane.b32.xlu0 %v2324, 112
      %v2475 = vpop.permute.xlu0 %2474
      %2476 = vrot.lane.b32.xlu0 %v2325, 112
      %v2477 = vpop.permute.xlu0 %2476
      %2478 = vrot.lane.b32.xlu0 %v2326, 112
      %v2479 = vpop.permute.xlu0 %2478
      %2480 = vrot.lane.b32.xlu0 %v2327, 112
      %v2481 = vpop.permute.xlu0 %2480
      %2482 = vrot.lane.b32.xlu0 %v2328, 112
      %v2483 = vpop.permute.xlu0 %2482
      %2484 = vrot.lane.b32.xlu0 %v2329, 112
      %v2485 = vpop.permute.xlu0 %2484
      %2486 = vrot.lane.b32.xlu0 %v2330, 112
      %v2487 = vpop.permute.xlu0 %2486
      %2488 = vrot.lane.b32.xlu0 %v2331, 112
      %v2489 = vpop.permute.xlu0 %2488
      %2490 = vrot.lane.b32.xlu0 %v2332, 112
      %v2491 = vpop.permute.xlu0 %2490
      %2492 = vrot.lane.b32.xlu0 %v2333, 112
      %v2493 = vpop.permute.xlu0 %2492
      %2494 = vrot.lane.b32.xlu0 %v2334, 112
      %v2495 = vpop.permute.xlu0 %2494
      %2496 = vrot.lane.b32.xlu0 %v2335, 112
      %v2497 = vpop.permute.xlu0 %2496
      %2498 = vrot.lane.b32.xlu0 %v2336, 112
      %v2499 = vpop.permute.xlu0 %2498
      %2500 = vrot.lane.b32.xlu0 %v2337, 112
      %v2501 = vpop.permute.xlu0 %2500
      %2502 = vrot.lane.b32.xlu0 %v2338, 112
      %v2503 = vpop.permute.xlu0 %2502
      %2504 = vrot.lane.b32.xlu0 %v2339, 112
      %v2505 = vpop.permute.xlu0 %2504
      %2506 = vrot.lane.b32.xlu0 %v2340, 112
      %v2507 = vpop.permute.xlu0 %2506
      %2508 = vrot.lane.b32.xlu0 %v2341, 112
      %v2509 = vpop.permute.xlu0 %2508
      %vm2510 = vcmask 916480
      %v2511 = vsel %vm2510, %v2463, %v2465
      %v2512 = vsel %vm2510, %v2465, %v2467
      %v2513 = vsel %vm2510, %v2469, %v2471
      %v2514 = vsel %vm2510, %v2471, %v2473
      %v2515 = vsel %vm2510, %v2475, %v2477
      %v2516 = vsel %vm2510, %v2477, %v2479
      %v2517 = vsel %vm2510, %v2481, %v2483
      %v2518 = vsel %vm2510, %v2483, %v2485
      %v2519 = vsel %vm2510, %v2487, %v2489
      %v2520 = vsel %vm2510, %v2489, %v2491
      %v2521 = vsel %vm2510, %v2493, %v2495
      %v2522 = vsel %vm2510, %v2495, %v2497
      %v2523 = vsel %vm2510, %v2499, %v2501
      %v2524 = vsel %vm2510, %v2501, %v2503
      %v2525 = vsel %vm2510, %v2505, %v2507
      %v2526 = vsel %vm2510, %v2507, %v2509
      %v2551 = vmax.f32 %v2318, %v2511
      %v2552 = vmax.f32 %v2319, %v2512
      %v2553 = vmax.f32 %v2320, %v2467
      %v2554 = vmax.f32 %v2321, %v2513
      %v2555 = vmax.f32 %v2322, %v2514
      %v2556 = vmax.f32 %v2323, %v2473
      %v2557 = vmax.f32 %v2324, %v2515
      %v2558 = vmax.f32 %v2325, %v2516
      %v2559 = vmax.f32 %v2326, %v2479
      %v2560 = vmax.f32 %v2327, %v2517
      %v2561 = vmax.f32 %v2328, %v2518
      %v2562 = vmax.f32 %v2329, %v2485
      %v2563 = vmax.f32 %v2330, %v2519
      %v2564 = vmax.f32 %v2331, %v2520
      %v2565 = vmax.f32 %v2332, %v2491
      %v2566 = vmax.f32 %v2333, %v2521
      %v2567 = vmax.f32 %v2334, %v2522
      %v2568 = vmax.f32 %v2335, %v2497
      %v2569 = vmax.f32 %v2336, %v2523
      %v2570 = vmax.f32 %v2337, %v2524
      %v2571 = vmax.f32 %v2338, %v2503
      %v2572 = vmax.f32 %v2339, %v2525
      %v2573 = vmax.f32 %v2340, %v2526
      %v2574 = vmax.f32 %v2341, %v2509
      %2599 = vrot.lane.b32.xlu0 %v2551, 32
      %v2600 = vpop.permute.xlu0 %2599
      %2601 = vrot.lane.b32.xlu0 %v2552, 32
      %v2602 = vpop.permute.xlu0 %2601
      %2603 = vrot.lane.b32.xlu0 %v2553, 32
      %v2604 = vpop.permute.xlu0 %2603
      %2605 = vrot.lane.b32.xlu0 %v2554, 32
      %v2606 = vpop.permute.xlu0 %2605
      %2607 = vrot.lane.b32.xlu0 %v2555, 32
      %v2608 = vpop.permute.xlu0 %2607
      %2609 = vrot.lane.b32.xlu0 %v2556, 32
      %v2610 = vpop.permute.xlu0 %2609
      %2611 = vrot.lane.b32.xlu0 %v2557, 32
      %v2612 = vpop.permute.xlu0 %2611
      %2613 = vrot.lane.b32.xlu0 %v2558, 32
      %v2614 = vpop.permute.xlu0 %2613
      %2615 = vrot.lane.b32.xlu0 %v2559, 32
      %v2616 = vpop.permute.xlu0 %2615
      %2617 = vrot.lane.b32.xlu0 %v2560, 32
      %v2618 = vpop.permute.xlu0 %2617
      %2619 = vrot.lane.b32.xlu0 %v2561, 32
      %v2620 = vpop.permute.xlu0 %2619
      %2621 = vrot.lane.b32.xlu0 %v2562, 32
      %v2622 = vpop.permute.xlu0 %2621
      %2623 = vrot.lane.b32.xlu0 %v2563, 32
      %v2624 = vpop.permute.xlu0 %2623
      %2625 = vrot.lane.b32.xlu0 %v2564, 32
      %v2626 = vpop.permute.xlu0 %2625
      %2627 = vrot.lane.b32.xlu0 %v2565, 32
      %v2628 = vpop.permute.xlu0 %2627
      %2629 = vrot.lane.b32.xlu0 %v2566, 32
      %v2630 = vpop.permute.xlu0 %2629
      %2631 = vrot.lane.b32.xlu0 %v2567, 32
      %v2632 = vpop.permute.xlu0 %2631
      %2633 = vrot.lane.b32.xlu0 %v2568, 32
      %v2634 = vpop.permute.xlu0 %2633
      %2635 = vrot.lane.b32.xlu0 %v2569, 32
      %v2636 = vpop.permute.xlu0 %2635
      %2637 = vrot.lane.b32.xlu0 %v2570, 32
      %v2638 = vpop.permute.xlu0 %2637
      %2639 = vrot.lane.b32.xlu0 %v2571, 32
      %v2640 = vpop.permute.xlu0 %2639
      %2641 = vrot.lane.b32.xlu0 %v2572, 32
      %v2642 = vpop.permute.xlu0 %2641
      %2643 = vrot.lane.b32.xlu0 %v2573, 32
      %v2644 = vpop.permute.xlu0 %2643
      %2645 = vrot.lane.b32.xlu0 %v2574, 32
      %v2646 = vpop.permute.xlu0 %2645
      %vm2647 = vcmask 261120
      %v2648 = vsel %vm2647, %v2600, %v2602
      %v2649 = vsel %vm2647, %v2602, %v2604
      %v2650 = vsel %vm2647, %v2606, %v2608
      %v2651 = vsel %vm2647, %v2608, %v2610
      %v2652 = vsel %vm2647, %v2612, %v2614
      %v2653 = vsel %vm2647, %v2614, %v2616
      %v2654 = vsel %vm2647, %v2618, %v2620
      %v2655 = vsel %vm2647, %v2620, %v2622
      %v2656 = vsel %vm2647, %v2624, %v2626
      %v2657 = vsel %vm2647, %v2626, %v2628
      %v2658 = vsel %vm2647, %v2630, %v2632
      %v2659 = vsel %vm2647, %v2632, %v2634
      %v2660 = vsel %vm2647, %v2636, %v2638
      %v2661 = vsel %vm2647, %v2638, %v2640
      %v2662 = vsel %vm2647, %v2642, %v2644
      %v2663 = vsel %vm2647, %v2644, %v2646
      %v2680 = vmax.f32 %v2446, %v2648
      %v2681 = vmax.f32 %v2447, %v2649
      %v2682 = vmax.f32 %v2448, %v2650
      %v2683 = vmax.f32 %v2449, %v2651
      %v2684 = vmax.f32 %v2450, %v2652
      %v2685 = vmax.f32 %v2451, %v2653
      %v2686 = vmax.f32 %v2452, %v2654
      %v2687 = vmax.f32 %v2453, %v2655
      %v2688 = vmax.f32 %v2454, %v2656
      %v2689 = vmax.f32 %v2455, %v2657
      %v2690 = vmax.f32 %v2456, %v2658
      %v2691 = vmax.f32 %v2457, %v2659
      %v2692 = vmax.f32 %v2458, %v2660
      %v2693 = vmax.f32 %v2459, %v2661
      %v2694 = vmax.f32 %v2460, %v2662
      %v2695 = vmax.f32 %v2461, %v2663
      %v2696 = vld [vmem:[%s11] sm:$0xff]
      %v2697 = vld [vmem:[%s11 + $0x8] sm:$0xff]
      %v2698 = vld [vmem:[%s11 + $0x10] sm:$0xff]
      %v2699 = vld [vmem:[%s11 + $0x18] sm:$0xff]
      %v2700 = vld [vmem:[%s11 + $0x20] sm:$0xff]
      %v2701 = vld [vmem:[%s11 + $0x28] sm:$0xff]
      %v2702 = vld [vmem:[%s11 + $0x30] sm:$0xff]
      %v2703 = vld [vmem:[%s11 + $0x38] sm:$0xff]
      %2705 = vset.pattern.permute.xlu0 0
      %2706 = vperm.xlu0 %2705, %v2696
      %v2707 = vpop.permute.xlu0 %2706
      %2710 = vset.pattern.permute.xlu0 0
      %2711 = vperm.xlu0 %2710, %v2697
      %v2712 = vpop.permute.xlu0 %2711
      %2715 = vset.pattern.permute.xlu0 0
      %2716 = vperm.xlu0 %2715, %v2698
      %v2717 = vpop.permute.xlu0 %2716
      %2720 = vset.pattern.permute.xlu0 0
      %2721 = vperm.xlu0 %2720, %v2699
      %v2722 = vpop.permute.xlu0 %2721
      %2725 = vset.pattern.permute.xlu0 0
      %2726 = vperm.xlu0 %2725, %v2700
      %v2727 = vpop.permute.xlu0 %2726
      %2730 = vset.pattern.permute.xlu0 0
      %2731 = vperm.xlu0 %2730, %v2701
      %v2732 = vpop.permute.xlu0 %2731
      %2735 = vset.pattern.permute.xlu0 0
      %2736 = vperm.xlu0 %2735, %v2702
      %v2737 = vpop.permute.xlu0 %2736
      %2740 = vset.pattern.permute.xlu0 0
      %2741 = vperm.xlu0 %2740, %v2703
      %v2742 = vpop.permute.xlu0 %2741
      %v2744 = vadd.f32 %v2680, %v2707
      %v2745 = vadd.f32 %v2681, %v2707
      %v2746 = vadd.f32 %v2682, %v2712
      %v2747 = vadd.f32 %v2683, %v2712
      %v2748 = vadd.f32 %v2684, %v2717
      %v2749 = vadd.f32 %v2685, %v2717
      %v2750 = vadd.f32 %v2686, %v2722
      %v2751 = vadd.f32 %v2687, %v2722
      %v2752 = vadd.f32 %v2688, %v2727
      %v2753 = vadd.f32 %v2689, %v2727
      %v2754 = vadd.f32 %v2690, %v2732
      %v2755 = vadd.f32 %v2691, %v2732
      %v2756 = vadd.f32 %v2692, %v2737
      %v2757 = vadd.f32 %v2693, %v2737
      %v2758 = vadd.f32 %v2694, %v2742
      %v2759 = vadd.f32 %v2695, %v2742
      %v2760 = vmax.f32 %v2744, 0.0
      %v2761 = vmax.f32 %v2745, 0.0
      %v2762 = vmax.f32 %v2746, 0.0
      %v2763 = vmax.f32 %v2747, 0.0
      %v2764 = vmax.f32 %v2748, 0.0
      %v2765 = vmax.f32 %v2749, 0.0
      %v2766 = vmax.f32 %v2750, 0.0
      %v2767 = vmax.f32 %v2751, 0.0
      %v2768 = vmax.f32 %v2752, 0.0
      %v2769 = vmax.f32 %v2753, 0.0
      %v2770 = vmax.f32 %v2754, 0.0
      %v2771 = vmax.f32 %v2755, 0.0
      %v2772 = vmax.f32 %v2756, 0.0
      %v2773 = vmax.f32 %v2757, 0.0
      %v2774 = vmax.f32 %v2758, 0.0
      %v2775 = vmax.f32 %v2759, 0.0
      %v2776 = vld [vmem:[%s12] sm:$0xff]
      %v2777 = vld [vmem:[%s12 + $0x8] sm:$0xff]
      %v2778 = vld [vmem:[%s12 + $0x10] sm:$0xff]
      %v2779 = vld [vmem:[%s12 + $0x18] sm:$0xff]
      %v2780 = vld [vmem:[%s12 + $0x20] sm:$0xff]
      %v2781 = vld [vmem:[%s12 + $0x28] sm:$0xff]
      %v2782 = vld [vmem:[%s12 + $0x30] sm:$0xff]
      %v2783 = vld [vmem:[%s12 + $0x38] sm:$0xff]
      %v2784 = vld [vmem:[%s12 + $0x40] sm:$0xff]
      %v2785 = vld [vmem:[%s12 + $0x48] sm:$0xff]
      %v2786 = vld [vmem:[%s12 + $0x50] sm:$0xff]
      %v2787 = vld [vmem:[%s12 + $0x58] sm:$0xff]
      %v2788 = vld [vmem:[%s12 + $0x60] sm:$0xff]
      %v2789 = vld [vmem:[%s12 + $0x68] sm:$0xff]
      %v2790 = vld [vmem:[%s12 + $0x70] sm:$0xff]
      %v2791 = vld [vmem:[%s12 + $0x78] sm:$0xff]
      %v2792 = vld [vmem:[%s12 + $0x80] sm:$0xff]
      %v2793 = vld [vmem:[%s12 + $0x88] sm:$0xff]
      %v2794 = vld [vmem:[%s12 + $0x90] sm:$0xff]
      %v2795 = vld [vmem:[%s12 + $0x98] sm:$0xff]
      %v2796 = vld [vmem:[%s12 + $0xa0] sm:$0xff]
      %v2797 = vld [vmem:[%s12 + $0xa8] sm:$0xff]
      %v2798 = vld [vmem:[%s12 + $0xb0] sm:$0xff]
      %v2799 = vld [vmem:[%s12 + $0xb8] sm:$0xff]
      %v2800 = vld [vmem:[%s12 + $0xc0] sm:$0xff]
      %v2801 = vld [vmem:[%s12 + $0xc8] sm:$0xff]
      %v2803 = vsel %vm2040, %v2761, 0
      %v2806 = vsel %vm2040, %v2763, 0
      %v2809 = vsel %vm2040, %v2765, 0
      %v2812 = vsel %vm2040, %v2767, 0
      %v2815 = vsel %vm2040, %v2769, 0
      %v2818 = vsel %vm2040, %v2771, 0
      %v2821 = vsel %vm2040, %v2773, 0
      %v2824 = vsel %vm2040, %v2775, 0
      %2826 = vmatprep.subr.mxu0 0.0
      %2827 = vmatpush1.msra.mxu0 %v2776
      %2828 = vmatprep.subr.mxu0 0.0
      %2829 = vmatpush1.msra.mxu0 %v2777
      %2830 = vmatprep.subr.mxu0 0.0
      %2831 = vmatpush1.msra.mxu0 %v2778
      %2832 = vmatprep.subr.mxu0 0.0
      %2833 = vmatpush1.msra.mxu0 %v2779
      %2834 = vmatprep.subr.mxu0 0.0
      %2835 = vmatpush1.msra.mxu0 %v2780
      %2836 = vmatprep.subr.mxu0 0.0
      %2837 = vmatpush1.msra.mxu0 %v2781
      %2838 = vmatprep.subr.mxu0 0.0
      %2839 = vmatpush1.msra.mxu0 %v2782
      %2840 = vmatprep.subr.mxu0 0.0
      %2841 = vmatpush1.msra.mxu0 %v2783
      %2842 = vmatprep.subr.mxu0 0.0
      %2843 = vmatpush1.msra.mxu0 %v2784
      %2844 = vmatprep.subr.mxu0 0.0
      %2845 = vmatpush1.msra.mxu0 %v2785
      %2846 = vmatprep.subr.mxu0 0.0
      %2847 = vmatpush1.msra.mxu0 %v2786
      %2848 = vmatprep.subr.mxu0 0.0
      %2849 = vmatpush1.msra.mxu0 %v2787
      %2850 = vmatprep.subr.mxu0 0.0
      %2851 = vmatpush1.msra.mxu0 %v2788
      %2852 = vmatprep.subr.mxu0 0.0
      %2853 = vmatpush1.msra.mxu0 %v2789
      %2854 = vmatprep.subr.mxu0 0.0
      %2855 = vmatpush1.msra.mxu0 %v2790
      %2856 = vmatprep.subr.mxu0 0.0
      %2857 = vmatpush1.msra.mxu0 %v2791
      %2858 = vmatprep.subr.mxu0 0.0
      %2859 = vmatpush1.msra.mxu0 %v2792
      %2860 = vmatprep.subr.mxu0 0.0
      %2861 = vmatpush1.msra.mxu0 %v2793
      %2862 = vmatprep.subr.mxu0 0.0
      %2863 = vmatpush1.msra.mxu0 %v2794
      %2864 = vmatprep.subr.mxu0 0.0
      %2865 = vmatpush1.msra.mxu0 %v2795
      %2866 = vmatprep.subr.mxu0 0.0
      %2867 = vmatpush1.msra.mxu0 %v2796
      %2868 = vmatprep.subr.mxu0 0.0
      %2869 = vmatpush1.msra.mxu0 %v2797
      %2870 = vmatprep.subr.mxu0 0.0
      %2871 = vmatpush1.msra.mxu0 %v2798
      %2872 = vmatprep.subr.mxu0 0.0
      %2873 = vmatpush1.msra.mxu0 %v2799
      %2874 = vmatprep.subr.mxu0 0.0
      %2875 = vmatpush1.msra.mxu0 %v2800
      %2876 = vmatprep.subr.mxu0 0.0
      %2877 = vmatpush1.msra.mxu0 %v2801
      %2878 = vmatprep.subr.mxu0 0.0
      %2879 = vmatpush1.msra.mxu0 0.0
      %2880 = vmatprep.subr.mxu0 0.0
      %2881 = vmatpush1.msra.mxu0 0.0
      %2882 = vmatprep.subr.mxu0 0.0
      %2883 = vmatpush1.msra.mxu0 0.0
      %2884 = vmatprep.subr.mxu0 0.0
      %2885 = vmatpush1.msra.mxu0 0.0
      %2886 = vmatprep.subr.mxu0 0.0
      %2887 = vmatpush1.msra.mxu0 0.0
      %2888 = vmatprep.subr.mxu0 0.0
      %2889 = vmatpush1.msra.mxu0 0.0
      %2890 = vmatprep.mubr.f32.mxu0 %v2803
      %2891 = vmatmul.mubr.f32.gmra.mrb[0].mxu0 %v2760
      %v2892 = vpop.f32.mrb[0].mxu0
      %v2893 = vadd.f32 0.0, %v2892
      %v2894 = vpop.f32.mrb[0].mxu0
      %2895 = vmatprep.mubr.f32.mxu0 %v2806
      %2896 = vmatmul.mubr.f32.gmra.mrb[0].mxu0 %v2762
      %v2897 = vpop.f32.mrb[0].mxu0
      %v2898 = vadd.f32 0.0, %v2897
      %v2899 = vpop.f32.mrb[0].mxu0
      %2900 = vmatprep.mubr.f32.mxu0 %v2809
      %2901 = vmatmul.mubr.f32.gmra.mrb[0].mxu0 %v2764
      %v2902 = vpop.f32.mrb[0].mxu0
      %v2903 = vadd.f32 0.0, %v2902
      %v2904 = vpop.f32.mrb[0].mxu0
      %2905 = vmatprep.mubr.f32.mxu0 %v2812
      %2906 = vmatmul.mubr.f32.gmra.mrb[0].mxu0 %v2766
      %v2907 = vpop.f32.mrb[0].mxu0
      %v2908 = vadd.f32 0.0, %v2907
      %v2909 = vpop.f32.mrb[0].mxu0
      %2910 = vmatprep.mubr.f32.mxu0 %v2815
      %2911 = vmatmul.mubr.f32.gmra.mrb[0].mxu0 %v2768
      %v2912 = vpop.f32.mrb[0].mxu0
      %v2913 = vadd.f32 0.0, %v2912
      %v2914 = vpop.f32.mrb[0].mxu0
      %2915 = vmatprep.mubr.f32.mxu0 %v2818
      %2916 = vmatmul.mubr.f32.gmra.mrb[0].mxu0 %v2770
      %v2917 = vpop.f32.mrb[0].mxu0
      %v2918 = vadd.f32 0.0, %v2917
      %v2919 = vpop.f32.mrb[0].mxu0
      %2920 = vmatprep.mubr.f32.mxu0 %v2821
      %2921 = vmatmul.mubr.f32.gmra.mrb[0].mxu0 %v2772
      %v2922 = vpop.f32.mrb[0].mxu0
      %v2923 = vadd.f32 0.0, %v2922
      %v2924 = vpop.f32.mrb[0].mxu0
      %2925 = vmatprep.mubr.f32.mxu0 %v2824
      %2926 = vmatmul.mubr.f32.gmra.mrb[0].mxu0 %v2774
      %v2927 = vpop.f32.mrb[0].mxu0
      %v2928 = vadd.f32 0.0, %v2927
      %v2929 = vpop.f32.mrb[0].mxu0
      %2930 = vdwg.mxu0
      %v2931 = vld [vmem:[%s13] sm:$0x3f]
      %v2932 = vld [vmem:[%s14] sm:$0x3f]
      %v2934 = vsel %vm493, %v2931, 0
      %2936 = vmatprep.subr.mxu0 0.0
      %2937 = vmatpush1.msra.mxu0 %v2893
      %2938 = vmatprep.subr.mxu0 0.0
      %2939 = vmatpush1.msra.mxu0 %v2898
      %2940 = vmatprep.subr.mxu0 0.0
      %2941 = vmatpush1.msra.mxu0 %v2903
      %2942 = vmatprep.subr.mxu0 0.0
      %2943 = vmatpush1.msra.mxu0 %v2908
      %2944 = vmatprep.subr.mxu0 0.0
      %2945 = vmatpush1.msra.mxu0 %v2913
      %2946 = vmatprep.subr.mxu0 0.0
      %2947 = vmatpush1.msra.mxu0 %v2918
      %2948 = vmatprep.subr.mxu0 0.0
      %2949 = vmatpush1.msra.mxu0 %v2923
      %2950 = vmatprep.subr.mxu0 0.0
      %2951 = vmatpush1.msra.mxu0 %v2928
      %2952 = vmatprep.subr.mxu0 0.0
      %2953 = vmatpush1.msra.mxu0 0.0
      %2954 = vmatprep.subr.mxu0 0.0
      %2955 = vmatpush1.msra.mxu0 0.0
      %2956 = vmatprep.subr.mxu0 0.0
      %2957 = vmatpush1.msra.mxu0 0.0
      %2958 = vmatprep.subr.mxu0 0.0
      %2959 = vmatpush1.msra.mxu0 0.0
      %2960 = vmatprep.subr.mxu0 0.0
      %2961 = vmatpush1.msra.mxu0 0.0
      %2962 = vmatprep.subr.mxu0 0.0
      %2963 = vmatpush1.msra.mxu0 0.0
      %2964 = vmatprep.subr.mxu0 0.0
      %2965 = vmatpush1.msra.mxu0 0.0
      %2966 = vmatprep.subr.mxu0 0.0
      %2967 = vmatpush1.msra.mxu0 0.0
      %2968 = vmatprep.subr.mxu0 0.0
      %2969 = vmatpush1.msra.mxu0 0.0
      %2970 = vmatprep.subr.mxu0 0.0
      %2971 = vmatpush1.msra.mxu0 0.0
      %2972 = vmatprep.subr.mxu0 0.0
      %2973 = vmatpush1.msra.mxu0 0.0
      %2974 = vmatprep.subr.mxu0 0.0
      %2975 = vmatpush1.msra.mxu0 0.0
      %2976 = vmatprep.subr.mxu0 0.0
      %2977 = vmatpush1.msra.mxu0 0.0
      %2978 = vmatprep.subr.mxu0 0.0
      %2979 = vmatpush1.msra.mxu0 0.0
      %2980 = vmatprep.subr.mxu0 0.0
      %2981 = vmatpush1.msra.mxu0 0.0
      %2982 = vmatprep.subr.mxu0 0.0
      %2983 = vmatpush1.msra.mxu0 0.0
      %2984 = vmatprep.subr.mxu0 0.0
      %2985 = vmatpush1.msra.mxu0 0.0
      %2986 = vmatprep.subr.mxu0 0.0
      %2987 = vmatpush1.msra.mxu0 0.0
      %2988 = vmatprep.subr.mxu0 0.0
      %2989 = vmatpush1.msra.mxu0 0.0
      %2990 = vmatprep.subr.mxu0 0.0
      %2991 = vmatpush1.msra.mxu0 0.0
      %2992 = vmatprep.subr.mxu0 0.0
      %2993 = vmatpush1.msra.mxu0 0.0
      %2994 = vmatprep.subr.mxu0 0.0
      %2995 = vmatpush1.msra.mxu0 0.0
      %2996 = vmatprep.subr.mxu0 0.0
      %2997 = vmatpush1.msra.mxu0 0.0
      %2998 = vmatprep.subr.mxu0 0.0
      %2999 = vmatpush1.msra.mxu0 0.0
      %3000 = vmatprep.mubr.f32.mxu0 0.0
      %3001 = vmatmul.mubr.f32.gmra.mrb[0].mxu0 %v2934
      %v3002 = vpop.f32.mrb[0].mxu0
      %v3003 = vadd.f32 %v2932, %v3002
      %v3004 = vpop.f32.mrb[0].mxu0
      %3005 = vdwg.mxu0
      %vm3006 = vcmask 5120
      %3007 = vst.msk [vmem:[%s492] sm:$0x3f] %vm3006, %v3003
      %p3008 = scmp.lt.s32.totalorder %s26, 1
      %s3009 = scalar_select %p3008, %s26, 1
      %s3010 = smul.addr %s3009, 8
      %s3011 = scalar_lea.vmem %s15, %s3010
      // Predicated region
      $region81: #{net_forward.1} parent=79 // pred_check
        %p3012 = pneg %p364
      $region82: #{net_forward.1} parent=79 // pred_check_branch
        %3014 = sbr.rel (%p3012) target = $region84
      $region83: #{net_forward.1} parent=79 // pred_region
        _
      $region84: #{net_forward.1} parent=79 // pred_fallthru
        _
    $region80: #{net_forward.1} parent=5 // pred_fallthru
      _
    %p3015 = scmp.le.s32.totalorder 2, %s21
    // Predicated region
    $region85: #{net_forward.1} parent=5 // pred_check
      %p3016 = pneg %p3015
    $region86: #{net_forward.1} parent=5 // pred_check_branch
      %3018 = sbr.rel (%p3016) target = $region88
    $region87: #{net_forward.1} parent=5 // pred_region
      %s3019 = ssub.s32 %s21, 2
      // Predicated region
      $region89: #{net_forward.1} parent=87 // pred_check
        %p3020 = pneg %p370
      $region90: #{net_forward.1} parent=87 // pred_check_branch
        %3022 = sbr.rel (%p3020) target = $region92
      $region91: #{net_forward.1} parent=87 // pred_region
        %p3023 = scmp.lt.s32.totalorder %s27, 1
        %s3024 = scalar_select %p3023, %s27, 1
        %s3025 = smul.addr %s3024, 8
        %s3026 = scalar_lea.vmem %s15, %s3025
      $region92: #{net_forward.1} parent=87 // pred_fallthru
        _
    $region88: #{net_forward.1} parent=5 // pred_fallthru
      _
  $region6: #{net_forward.1} parent=0 // loop_footer
    %s25 = sadd.s32 1, %s21
  $region7: #{net_forward.1} parent=0 // loop_footer_branch
    %20 = sbr.rel target = $region3
  $region8: #{net_forward.1} parent=0 // loop_exit
    _

</llo_original>
